<compile_context>
chip_gen: v7x
topology: tpu7x:2x2x1
jax: 0.10.0
libtpu: 0.0.40
codegen_flags: <defaults>
</compile_context>

<pallas_src>
import functools

import jax
import jax.numpy as jnp
from jax.experimental import pallas as pl
from jax.experimental.pallas import tpu as pltpu


# --------------------------------------------------------------------------
# In-kernel helpers
# --------------------------------------------------------------------------
def _assemble_slab(x_ref, top_ref, bot_ref, slab_ref, *, TH, W):
    """Build the (TH+2, W+2, Cin) zero-padded row slab in VMEM scratch.

    x_ref:   (1, TH, W, Cin)  current row tile (auto-pipelined)
    top_ref: (1, 1,  W, Cin)  row just above the tile (clamped at image top)
    bot_ref: (1, 1,  W, Cin)  row just below the tile (clamped at image bottom)
    """
    t = pl.program_id(1)
    last = pl.num_programs(1) - 1
    cin = slab_ref.shape[-1]
    dt = slab_ref.dtype

    # interior rows
    slab_ref[1:TH + 1, 1:W + 1, :] = x_ref[0]
    # left / right zero columns.  Rewritten every step: scratch persists
    # across grid steps and megacore sharding must never observe an
    # uninitialized border on either core.
    zcol = jnp.zeros((TH + 2, 1, cin), dt)
    slab_ref[:, 0:1, :] = zcol
    slab_ref[:, W + 1:W + 2, :] = zcol
    # top / bottom halo rows (zero at the image boundary)
    top = top_ref[0]
    slab_ref[0:1, 1:W + 1, :] = jnp.where(t > 0, top, jnp.zeros_like(top))
    bot = bot_ref[0]
    slab_ref[TH + 1:TH + 2, 1:W + 1, :] = jnp.where(t < last, bot,
                                                    jnp.zeros_like(bot))


def _conv_tile(slab_ref, w_ref, scale_ref, shift_ref, *, TH, W, fold):
    """3x3 conv (stride 1, pad 1) + folded BN + ReLU on one (TH, W) row tile.

    slab_ref:  (TH+2, W+2, Cin)   zero-padded slab (VMEM scratch)
    w_ref:     (3, 3*Cin, Cout)   if fold else (9, Cin, Cout)  (tap = kh*3+kw)
    scale_ref: (1, Cout) f32      gamma / sqrt(var + eps)
    shift_ref: (1, Cout) f32      beta + scale * (bias - running_mean)
    returns:   (TH*W, Cout) f32 post-ReLU activations
    """
    cin = slab_ref.shape[-1]
    cout = w_ref.shape[-1]
    acc = jnp.zeros((TH * W, cout), jnp.float32)
    if fold:
        # Per-kh split: 3 accumulating MXU dots with K = 3*Cin.  The full
        # K = 9*Cin concat's vld/vst traffic is co-critical with the faster
        # MXU on v6e/v7x and its patch is 3x larger; K = 3*Cin already fills
        # the MXU K depth for Cin >= 64 while freeing ~2/3 of the patch VMEM.
        for kh in range(3):
            patch = jnp.concatenate(
                [slab_ref[kh:kh + TH, kw:kw + W, :] for kw in range(3)],
                axis=-1).reshape(TH * W, 3 * cin)
            acc = acc + jnp.dot(patch, w_ref[kh],
                                preferred_element_type=jnp.float32)
    else:
        # tiny / unaligned Cin (toy test sizes): 9 accumulating K = Cin dots
        for kh in range(3):
            for kw in range(3):
                tap = slab_ref[kh:kh + TH, kw:kw + W, :].reshape(TH * W, cin)
                acc = acc + jnp.dot(tap, w_ref[kh * 3 + kw],
                                    preferred_element_type=jnp.float32)
    y = acc * scale_ref[...] + shift_ref[...]
    return jnp.maximum(y, 0.0)


def _conv_bn_relu_kernel(x_ref, top_ref, bot_ref, w_ref, scale_ref, shift_ref,
                         o_ref, slab_ref, *, TH, W, fold):
    """conv + BN + ReLU; o_ref: (1, TH, W, Cout)."""
    _assemble_slab(x_ref, top_ref, bot_ref, slab_ref, TH=TH, W=W)
    y = _conv_tile(slab_ref, w_ref, scale_ref, shift_ref, TH=TH, W=W, fold=fold)
    o_ref[0] = y.reshape(TH, W, o_ref.shape[-1]).astype(o_ref.dtype)


def _conv_bn_relu_pool_kernel(x_ref, top_ref, bot_ref, w_ref, scale_ref,
                              shift_ref, pooled_ref, idx_ref, slab_ref, y_ref,
                              *, TH, W, fold):
    """conv + BN + ReLU with fused 2x2/2 max-pool (+argmax) epilogue.

    pooled_ref: (1, TH//2, W//2, Cout) bf16
    idx_ref:    (1, TH//2, W//2, Cout) int32, flat h*W + w of the pre-pool map
    y_ref:      VMEM scratch (TH, W, Cout) f32 (full-res conv3 tile, never HBM)
    """
    cout = pooled_ref.shape[-1]
    _assemble_slab(x_ref, top_ref, bot_ref, slab_ref, TH=TH, W=W)
    y = _conv_tile(slab_ref, w_ref, scale_ref, shift_ref, TH=TH, W=W, fold=fold)
    y_ref[...] = y.reshape(TH, W, cout)

    HP, WP = TH // 2, W // 2
    # window corners via strided reads of the scratch
    v00 = y_ref[pl.ds(0, HP, stride=2), pl.ds(0, WP, stride=2), :]
    v01 = y_ref[pl.ds(0, HP, stride=2), pl.ds(1, WP, stride=2), :]
    v10 = y_ref[pl.ds(1, HP, stride=2), pl.ds(0, WP, stride=2), :]
    v11 = y_ref[pl.ds(1, HP, stride=2), pl.ds(1, WP, stride=2), :]

    # first-occurrence argmax over window order (0,0),(0,1),(1,0),(1,1)
    m0 = jnp.maximum(v00, v01)
    a0 = jnp.where(v01 > v00, 1, 0)
    m1 = jnp.maximum(v10, v11)
    a1 = jnp.where(v11 > v10, 3, 2)
    vmax = jnp.maximum(m0, m1)
    amax = jnp.where(m1 > m0, a1, a0).astype(jnp.int32)

    # global flat index = (2*oh + dy) * W + (2*ow + dx); iota + bit ops only
    t = pl.program_id(1)
    lh = jax.lax.broadcasted_iota(jnp.int32, (HP, WP, cout), 0)
    lw = jax.lax.broadcasted_iota(jnp.int32, (HP, WP, cout), 1)
    row = t * TH + 2 * lh + (amax >> 1)
    col = 2 * lw + (amax & 1)

    pooled_ref[0] = vmax.astype(pooled_ref.dtype)
    idx_ref[0] = row * W + col


# --------------------------------------------------------------------------
# VMEM accounting & wrappers
# --------------------------------------------------------------------------
def _vmem_capacity_bytes():
    """Physical VMEM of the attached TPU; conservative (v7x) fallback."""
    try:
        return int(pltpu.get_tpu_info().vmem_capacity_bytes)
    except Exception:
        return 64 << 20


def _conv_step_vmem_bytes(TH, W, Cin, Cout, *, fuse_pool, fold):
    """Approximate bytes resident in VMEM for one grid step."""
    bf, f32, i32 = 2, 4, 4
    n = 2 * TH * W * Cin * bf                      # input row block (x2 bufs)
    n += 2 * 2 * W * Cin * bf                      # top/bottom halo rows (x2)
    n += (TH + 2) * (W + 2) * Cin * bf             # padded slab scratch
    n += 2 * 9 * Cin * Cout * bf                   # weights (x2 bufs)
    n += 2 * 2 * 2 * Cout * f32                    # scale + shift
    n += TH * W * (3 if fold else 1) * Cin * bf    # materialized MXU patch
    n += TH * W * Cout * f32                       # f32 accumulator
    if fuse_pool:
        n += TH * W * Cout * f32                               # pool scratch
        n += 2 * (TH // 2) * (W // 2) * Cout * (bf + i32)      # pooled + idx
    else:
        n += 2 * TH * W * Cout * bf                            # output block
    return n


def _pick_row_tile(H, W, Cin, Cout, *, fuse_pool, fold, budget_bytes):
    divs = [th for th in range(2, H + 1, 2) if H % th == 0]
    size = lambda th: _conv_step_vmem_bytes(th, W, Cin, Cout,
                                            fuse_pool=fuse_pool, fold=fold)
    fitting = [th for th in divs if size(th) <= budget_bytes] or divs[:1]
    # prefer >= 4 row tiles per image (real pipeline depth; >= 2 steps per
    # TensorCore under v7x megacore sharding) ...
    preferred = [th for th in fitting if th <= max(2, H // 4)] or fitting
    # ... but keep the MXU M dimension (TH*W) healthy when possible
    healthy = [th for th in preferred if th * W >= 512] or preferred
    return healthy[-1]


def conv3x3_bn_relu(x_nhwc, w_oihw, bias, gamma, beta, mean, var, *,
                    eps=1e-5, fuse_pool=False, out_dtype=jnp.bfloat16,
                    compute_dtype=jnp.bfloat16):
    """3x3 conv (stride 1, pad 1) + inference BN + ReLU, NHWC in/out.

    With fuse_pool=True, also performs 2x2/2 max-pool with indices in the same
    kernel and returns (pooled, indices_int32) at half spatial resolution.
    """
    B, H, W, Cin = x_nhwc.shape
    Cout = w_oihw.shape[0]
    assert H % 2 == 0 and W % 2 == 0, "even spatial dims required (2x2 pool)"

    # fold conv bias + BN running stats into per-channel f32 scale / shift
    scale = (gamma / jnp.sqrt(var + eps)).astype(jnp.float32)
    shift = (beta + scale * (bias - mean)).astype(jnp.float32)

    # Weights pre-shaped in HBM so the in-kernel access is a pure view:
    #   fold:     (3, 3*Cin, Cout), inner index = kw*Cin + ci  (per-kh dots)
    #   fallback: (9, Cin, Cout),   tap index = kh*3 + kw
    fold = (Cin % 64 == 0)
    w_k = jnp.transpose(w_oihw, (2, 3, 1, 0)).astype(compute_dtype)
    w = w_k.reshape(3, 3 * Cin, Cout) if fold else w_k.reshape(9, Cin, Cout)

    x = x_nhwc.astype(compute_dtype)       # NO jnp.pad: halo is built in-kernel

    vmem_cap = _vmem_capacity_bytes()
    TH = _pick_row_tile(H, W, Cin, Cout, fuse_pool=fuse_pool, fold=fold,
                        budget_bytes=(vmem_cap * 2) // 5)
    grid = (B, H // TH)

    in_specs = [
        # current row tile (auto double-buffered)
        pl.BlockSpec((1, TH, W, Cin), lambda b, t: (b, t, 0, 0)),
        # 1-row halo above / below: block row size 1 => returned index is an
        # element row; clamp at the image boundary (kernel substitutes zeros)
        pl.BlockSpec((1, 1, W, Cin),
                     lambda b, t: (b, jnp.maximum(t * TH - 1, 0), 0, 0)),
        pl.BlockSpec((1, 1, W, Cin),
                     lambda b, t: (b, jnp.minimum(t * TH + TH, H - 1), 0, 0)),
        # grid-invariant operands (constant index maps -> fetched once)
        pl.BlockSpec(w.shape, lambda b, t: (0, 0, 0)),
        pl.BlockSpec((1, Cout), lambda b, t: (0, 0)),
        pl.BlockSpec((1, Cout), lambda b, t: (0, 0)),
    ]
    cparams = pltpu.CompilerParams(
        dimension_semantics=("parallel", "parallel"),
        vmem_limit_bytes=int(vmem_cap * 0.9),
    )
    args = (x, x, x, w, scale.reshape(1, Cout), shift.reshape(1, Cout))
    slab = pltpu.VMEM((TH + 2, W + 2, Cin), compute_dtype)

    if not fuse_pool:
        kern = functools.partial(_conv_bn_relu_kernel, TH=TH, W=W, fold=fold)
        return pl.pallas_call(
            kern,
            out_shape=jax.ShapeDtypeStruct((B, H, W, Cout), out_dtype),
            grid=grid,
            in_specs=in_specs,
            out_specs=pl.BlockSpec((1, TH, W, Cout), lambda b, t: (b, t, 0, 0)),
            scratch_shapes=[slab],
            compiler_params=cparams,
        )(*args)

    kern = functools.partial(_conv_bn_relu_pool_kernel, TH=TH, W=W, fold=fold)
    pooled, idx = pl.pallas_call(
        kern,
        out_shape=(
            jax.ShapeDtypeStruct((B, H // 2, W // 2, Cout), out_dtype),
            jax.ShapeDtypeStruct((B, H // 2, W // 2, Cout), jnp.int32),
        ),
        grid=grid,
        in_specs=in_specs,
        out_specs=(
            pl.BlockSpec((1, TH // 2, W // 2, Cout), lambda b, t: (b, t, 0, 0)),
            pl.BlockSpec((1, TH // 2, W // 2, Cout), lambda b, t: (b, t, 0, 0)),
        ),
        scratch_shapes=[slab, pltpu.VMEM((TH, W, Cout), jnp.float32)],
        compiler_params=cparams,
    )(*args)
    return pooled, idx


# --------------------------------------------------------------------------
# Module
# --------------------------------------------------------------------------
class SegnetEncoderBlock3:
    """conv1 -> conv2 -> conv3 (each conv3x3 + BN + ReLU) -> maxpool2x2(idx)."""

    def __init__(self, in_channels, out_channels, key, compute_dtype=jnp.bfloat16):
        self.compute_dtype = compute_dtype
        keys = jax.random.split(key, 18)
        chans = [(in_channels, out_channels),
                 (out_channels, out_channels),
                 (out_channels, out_channels)]
        self.params = []
        k = 0
        for cin, cout in chans:
            p = {
                "w": 0.1 * jax.random.normal(keys[k + 0], (cout, cin, 3, 3), jnp.float32),
                "b": 0.1 * jax.random.normal(keys[k + 1], (cout,), jnp.float32),
                "gamma": 0.5 + jax.random.uniform(keys[k + 2], (cout,), jnp.float32),
                "beta": 0.1 * jax.random.normal(keys[k + 3], (cout,), jnp.float32),
                "mean": 0.1 * jax.random.normal(keys[k + 4], (cout,), jnp.float32),
                "var": 0.5 + jax.random.uniform(keys[k + 5], (cout,), jnp.float32),
            }
            self.params.append(p)
            k += 6

    def _apply(self, x, p, **kw):
        return conv3x3_bn_relu(x, p["w"], p["b"], p["gamma"], p["beta"],
                               p["mean"], p["var"],
                               compute_dtype=self.compute_dtype, **kw)

    def __call__(self, x_nchw):
        x = jnp.transpose(x_nchw, (0, 2, 3, 1))          # NCHW -> NHWC
        p1, p2, p3 = self.params
        x = self._apply(x, p1, out_dtype=self.compute_dtype)
        x = self._apply(x, p2, out_dtype=self.compute_dtype)
        B, H, W, _ = x.shape
        Cout = p3["w"].shape[0]
        output_size = (B, Cout, H, W)                    # pre-pool conv3 size
        pooled, idx = self._apply(x, p3, fuse_pool=True)  # conv3 + fused pool
        pooled = jnp.transpose(pooled, (0, 3, 1, 2)).astype(jnp.float32)
        indices = jnp.transpose(idx, (0, 3, 1, 2))
        return pooled, indices, output_size


# --------------------------------------------------------------------------
# Pure-JAX reference (NCHW, same bf16 quantization points) for verification
# --------------------------------------------------------------------------
def _ref_conv_bn_relu(x, p, eps=1e-5, compute_dtype=jnp.bfloat16):
    y = jax.lax.conv_general_dilated(
        x.astype(compute_dtype), p["w"].astype(compute_dtype),
        window_strides=(1, 1), padding=((1, 1), (1, 1)),
        dimension_numbers=("NCHW", "OIHW", "NCHW"),
        preferred_element_type=jnp.float32)
    scale = p["gamma"] / jnp.sqrt(p["var"] + eps)
    shift = p["beta"] + scale * (p["b"] - p["mean"])
    y = y * scale[None, :, None, None] + shift[None, :, None, None]
    return jnp.maximum(y, 0.0)


def _ref_maxpool(z):
    B, C, H, W = z.shape
    OH, OW = H // 2, W // 2
    win = (z.reshape(B, C, OH, 2, OW, 2)
           .transpose(0, 1, 2, 4, 3, 5)
           .reshape(B, C, OH, OW, 4))
    return win.max(axis=-1)


def _check_block(block, x, atol=2e-2, rtol=2e-2):
    pooled, indices, output_size = block(x)
    jax.block_until_ready((pooled, indices))

    ref = x
    for p in block.params:
        ref = _ref_conv_bn_relu(ref, p)
    ref_pooled = _ref_maxpool(ref)

    B, C, H, W = ref.shape
    assert pooled.shape == (B, C, H // 2, W // 2)
    assert indices.shape == (B, C, H // 2, W // 2)
    assert tuple(output_size) == (B, C, H, W)
    assert jnp.allclose(pooled, ref_pooled, atol=atol, rtol=rtol)

    # indices must point inside the right 2x2 window and select its max value
    gathered = jnp.take_along_axis(ref.reshape(B, C, H * W),
                                   indices.reshape(B, C, -1), axis=-1)
    gathered = gathered.reshape(B, C, H // 2, W // 2)
    assert jnp.allclose(gathered, ref_pooled, atol=atol, rtol=rtol)
    r, c = indices // W, indices % W
    oh = jnp.arange(H // 2, dtype=jnp.int32)[None, None, :, None]
    ow = jnp.arange(W // 2, dtype=jnp.int32)[None, None, None, :]
    assert bool(jnp.all((r // 2 == oh) & (c // 2 == ow)))


# --------------------------------------------------------------------------
if __name__ == "__main__":
    key = jax.random.PRNGKey(0)
    kx, kp, kx2, kp2 = jax.random.split(key, 4)

    # ---- main test: toy shapes (exercises the 9-dot, Cin % 64 != 0 path) ----
    B, Cin, Cout, H, W = 2, 4, 8, 16, 16
    x = jax.random.normal(kx, (B, Cin, H, W), jnp.float32)
    block = SegnetEncoderBlock3(Cin, Cout, kp)
    _check_block(block, x)

    # ---- second test: Cin = 64 exercises the per-kh K = 3*Cin fold path ----
    B2, C2, H2, W2 = 1, 64, 16, 16
    x2 = jax.random.normal(kx2, (B2, C2, H2, W2), jnp.float32)
    block2 = SegnetEncoderBlock3(C2, C2, kp2)
    _check_block(block2, x2)

    print("KERNEL_OK")
</pallas_src>

<mosaic_0001>
module attributes {stable_mosaic.version = 11 : i64} {
  func.func @_conv_bn_relu_kernel(%arg0: i32, %arg1: i32, %arg2: memref<1x4x16x4xbf16, #tpu.memory_space<vmem>>, %arg3: memref<1x1x16x4xbf16, #tpu.memory_space<vmem>>, %arg4: memref<1x1x16x4xbf16, #tpu.memory_space<vmem>>, %arg5: memref<9x4x8xbf16, #tpu.memory_space<vmem>>, %arg6: memref<1x8xf32, #tpu.memory_space<vmem>>, %arg7: memref<1x8xf32, #tpu.memory_space<vmem>>, %arg8: memref<1x4x16x8xbf16, #tpu.memory_space<vmem>>, %arg9: memref<6x18x4xbf16, #tpu.memory_space<vmem>>) attributes {dimension_semantics = [#tpu.dimension_semantics<parallel>, #tpu.dimension_semantics<parallel>], iteration_bounds = array<i64: 2, 4>, scalar_prefetch = 0 : i64, scratch_operands = 1 : i64, tpu.core_type = #tpu.core_type<tc>, window_params = [{transform_indices = @transform_0, window_bounds = array<i64: 1, 4, 16, 4>}, {transform_indices = @transform_1, window_bounds = array<i64: 1, 1, 16, 4>}, {transform_indices = @transform_2, window_bounds = array<i64: 1, 1, 16, 4>}, {pipeline_mode = #tpu.pipeline_mode<synchronous>, transform_indices = @transform_3, window_bounds = array<i64: 9, 4, 8>}, {pipeline_mode = #tpu.pipeline_mode<synchronous>, transform_indices = @transform_4, window_bounds = array<i64: 1, 8>}, {pipeline_mode = #tpu.pipeline_mode<synchronous>, transform_indices = @transform_5, window_bounds = array<i64: 1, 8>}, {transform_indices = @transform_6, window_bounds = array<i64: 1, 4, 16, 8>}]} {
    %c0 = arith.constant 0 : index
    %c0_0 = arith.constant 0 : index
    %c0_1 = arith.constant 0 : index
    %c0_2 = arith.constant 0 : index
    %0 = vector.load %arg2[%c0, %c0_0, %c0_1, %c0_2] : memref<1x4x16x4xbf16, #tpu.memory_space<vmem>>, vector<1x4x16x4xbf16>
    %1 = vector.shape_cast %0 : vector<1x4x16x4xbf16> to vector<4x16x4xbf16>
    %c1 = arith.constant 1 : index
    %c1_3 = arith.constant 1 : index
    %c0_4 = arith.constant 0 : index
    %2 = vector.load %arg9[%c1, %c1_3, %c0_4] : memref<6x18x4xbf16, #tpu.memory_space<vmem>>, vector<4x16x4xbf16>
    tpu.vector_store %arg9[%c1, %c1_3, %c0_4], %1 {strides = array<i32>} : memref<6x18x4xbf16, #tpu.memory_space<vmem>>, vector<4x16x4xbf16>,
    %cst = arith.constant 0.000000e+00 : bf16
    %3 = vector.broadcast %cst : bf16 to vector<6x1x4xbf16>
    %c0_5 = arith.constant 0 : index
    %c0_6 = arith.constant 0 : index
    %c0_7 = arith.constant 0 : index
    %4 = vector.load %arg9[%c0_5, %c0_6, %c0_7] : memref<6x18x4xbf16, #tpu.memory_space<vmem>>, vector<6x1x4xbf16>
    tpu.vector_store %arg9[%c0_5, %c0_6, %c0_7], %3 {strides = array<i32>} : memref<6x18x4xbf16, #tpu.memory_space<vmem>>, vector<6x1x4xbf16>,
    %c0_8 = arith.constant 0 : index
    %c17 = arith.constant 17 : index
    %c0_9 = arith.constant 0 : index
    %5 = vector.load %arg9[%c0_8, %c17, %c0_9] : memref<6x18x4xbf16, #tpu.memory_space<vmem>>, vector<6x1x4xbf16>
    tpu.vector_store %arg9[%c0_8, %c17, %c0_9], %3 {strides = array<i32>} : memref<6x18x4xbf16, #tpu.memory_space<vmem>>, vector<6x1x4xbf16>,
    %c0_10 = arith.constant 0 : index
    %c0_11 = arith.constant 0 : index
    %c0_12 = arith.constant 0 : index
    %c0_13 = arith.constant 0 : index
    %6 = vector.load %arg3[%c0_10, %c0_11, %c0_12, %c0_13] : memref<1x1x16x4xbf16, #tpu.memory_space<vmem>>, vector<1x1x16x4xbf16>
    %7 = vector.shape_cast %6 : vector<1x1x16x4xbf16> to vector<1x16x4xbf16>
    %c0_i32 = arith.constant 0 : i32
    %8 = arith.cmpi sgt, %arg1, %c0_i32 : i32
    %cst_14 = arith.constant 0.000000e+00 : bf16
    %9 = vector.broadcast %cst_14 : bf16 to vector<1x16x4xbf16>
    %10 = arith.select %8, %7, %9 : vector<1x16x4xbf16>
    %c0_15 = arith.constant 0 : index
    %c1_16 = arith.constant 1 : index
    %c0_17 = arith.constant 0 : index
    %11 = vector.load %arg9[%c0_15, %c1_16, %c0_17] : memref<6x18x4xbf16, #tpu.memory_space<vmem>>, vector<1x16x4xbf16>
    tpu.vector_store %arg9[%c0_15, %c1_16, %c0_17], %10 {strides = array<i32>} : memref<6x18x4xbf16, #tpu.memory_space<vmem>>, vector<1x16x4xbf16>,
    %c0_18 = arith.constant 0 : index
    %c0_19 = arith.constant 0 : index
    %c0_20 = arith.constant 0 : index
    %c0_21 = arith.constant 0 : index
    %12 = vector.load %arg4[%c0_18, %c0_19, %c0_20, %c0_21] : memref<1x1x16x4xbf16, #tpu.memory_space<vmem>>, vector<1x1x16x4xbf16>
    %13 = vector.shape_cast %12 : vector<1x1x16x4xbf16> to vector<1x16x4xbf16>
    %c3_i32 = arith.constant 3 : i32
    %14 = arith.cmpi slt, %arg1, %c3_i32 : i32
    %cst_22 = arith.constant 0.000000e+00 : bf16
    %15 = vector.broadcast %cst_22 : bf16 to vector<1x16x4xbf16>
    %16 = arith.select %14, %13, %15 : vector<1x16x4xbf16>
    %c5 = arith.constant 5 : index
    %c1_23 = arith.constant 1 : index
    %c0_24 = arith.constant 0 : index
    %17 = vector.load %arg9[%c5, %c1_23, %c0_24] : memref<6x18x4xbf16, #tpu.memory_space<vmem>>, vector<1x16x4xbf16>
    tpu.vector_store %arg9[%c5, %c1_23, %c0_24], %16 {strides = array<i32>} : memref<6x18x4xbf16, #tpu.memory_space<vmem>>, vector<1x16x4xbf16>,
    %cst_25 = arith.constant 0.000000e+00 : f32
    %18 = vector.broadcast %cst_25 : f32 to vector<64x8xf32>
    %c0_26 = arith.constant 0 : index
    %c0_27 = arith.constant 0 : index
    %c0_28 = arith.constant 0 : index
    %19 = vector.load %arg9[%c0_26, %c0_27, %c0_28] : memref<6x18x4xbf16, #tpu.memory_space<vmem>>, vector<4x16x4xbf16>
    %20 = vector.shape_cast %19 : vector<4x16x4xbf16> to vector<64x4xbf16>
    %c0_29 = arith.constant 0 : index
    %c0_30 = arith.constant 0 : index
    %c0_31 = arith.constant 0 : index
    %21 = vector.load %arg5[%c0_29, %c0_30, %c0_31] : memref<9x4x8xbf16, #tpu.memory_space<vmem>>, vector<1x4x8xbf16>
    %22 = vector.shape_cast %21 : vector<1x4x8xbf16> to vector<4x8xbf16>
    %cst_32 = arith.constant dense<0.000000e+00> : vector<64x8xf32>
    %23 = tpu.matmul %20, %22, %cst_32 {dimension_numbers = #tpu.dot_dimension_numbers<[1], [0], [0], [1], [0, 0, 1, 1], [], []>} : vector<64x4xbf16>, vector<4x8xbf16>, vector<64x8xf32> -> vector<64x8xf32>
    %24 = arith.addf %18, %23 : vector<64x8xf32>
    %c0_33 = arith.constant 0 : index
    %c1_34 = arith.constant 1 : index
    %c0_35 = arith.constant 0 : index
    %25 = vector.load %arg9[%c0_33, %c1_34, %c0_35] : memref<6x18x4xbf16, #tpu.memory_space<vmem>>, vector<4x16x4xbf16>
    %26 = vector.shape_cast %25 : vector<4x16x4xbf16> to vector<64x4xbf16>
    %c1_36 = arith.constant 1 : index
    %c0_37 = arith.constant 0 : index
    %c0_38 = arith.constant 0 : index
    %27 = vector.load %arg5[%c1_36, %c0_37, %c0_38] : memref<9x4x8xbf16, #tpu.memory_space<vmem>>, vector<1x4x8xbf16>
    %28 = vector.shape_cast %27 : vector<1x4x8xbf16> to vector<4x8xbf16>
    %cst_39 = arith.constant dense<0.000000e+00> : vector<64x8xf32>
    %29 = tpu.matmul %26, %28, %cst_39 {dimension_numbers = #tpu.dot_dimension_numbers<[1], [0], [0], [1], [0, 0, 1, 1], [], []>} : vector<64x4xbf16>, vector<4x8xbf16>, vector<64x8xf32> -> vector<64x8xf32>
    %30 = arith.addf %24, %29 : vector<64x8xf32>
    %c0_40 = arith.constant 0 : index
    %c2 = arith.constant 2 : index
    %c0_41 = arith.constant 0 : index
    %31 = vector.load %arg9[%c0_40, %c2, %c0_41] : memref<6x18x4xbf16, #tpu.memory_space<vmem>>, vector<4x16x4xbf16>
    %32 = vector.shape_cast %31 : vector<4x16x4xbf16> to vector<64x4xbf16>
    %c2_42 = arith.constant 2 : index
    %c0_43 = arith.constant 0 : index
    %c0_44 = arith.constant 0 : index
    %33 = vector.load %arg5[%c2_42, %c0_43, %c0_44] : memref<9x4x8xbf16, #tpu.memory_space<vmem>>, vector<1x4x8xbf16>
    %34 = vector.shape_cast %33 : vector<1x4x8xbf16> to vector<4x8xbf16>
    %cst_45 = arith.constant dense<0.000000e+00> : vector<64x8xf32>
    %35 = tpu.matmul %32, %34, %cst_45 {dimension_numbers = #tpu.dot_dimension_numbers<[1], [0], [0], [1], [0, 0, 1, 1], [], []>} : vector<64x4xbf16>, vector<4x8xbf16>, vector<64x8xf32> -> vector<64x8xf32>
    %36 = arith.addf %30, %35 : vector<64x8xf32>
    %c1_46 = arith.constant 1 : index
    %c0_47 = arith.constant 0 : index
    %c0_48 = arith.constant 0 : index
    %37 = vector.load %arg9[%c1_46, %c0_47, %c0_48] : memref<6x18x4xbf16, #tpu.memory_space<vmem>>, vector<4x16x4xbf16>
    %38 = vector.shape_cast %37 : vector<4x16x4xbf16> to vector<64x4xbf16>
    %c3 = arith.constant 3 : index
    %c0_49 = arith.constant 0 : index
    %c0_50 = arith.constant 0 : index
    %39 = vector.load %arg5[%c3, %c0_49, %c0_50] : memref<9x4x8xbf16, #tpu.memory_space<vmem>>, vector<1x4x8xbf16>
    %40 = vector.shape_cast %39 : vector<1x4x8xbf16> to vector<4x8xbf16>
    %cst_51 = arith.constant dense<0.000000e+00> : vector<64x8xf32>
    %41 = tpu.matmul %38, %40, %cst_51 {dimension_numbers = #tpu.dot_dimension_numbers<[1], [0], [0], [1], [0, 0, 1, 1], [], []>} : vector<64x4xbf16>, vector<4x8xbf16>, vector<64x8xf32> -> vector<64x8xf32>
    %42 = arith.addf %36, %41 : vector<64x8xf32>
    %c1_52 = arith.constant 1 : index
    %c1_53 = arith.constant 1 : index
    %c0_54 = arith.constant 0 : index
    %43 = vector.load %arg9[%c1_52, %c1_53, %c0_54] : memref<6x18x4xbf16, #tpu.memory_space<vmem>>, vector<4x16x4xbf16>
    %44 = vector.shape_cast %43 : vector<4x16x4xbf16> to vector<64x4xbf16>
    %c4 = arith.constant 4 : index
    %c0_55 = arith.constant 0 : index
    %c0_56 = arith.constant 0 : index
    %45 = vector.load %arg5[%c4, %c0_55, %c0_56] : memref<9x4x8xbf16, #tpu.memory_space<vmem>>, vector<1x4x8xbf16>
    %46 = vector.shape_cast %45 : vector<1x4x8xbf16> to vector<4x8xbf16>
    %cst_57 = arith.constant dense<0.000000e+00> : vector<64x8xf32>
    %47 = tpu.matmul %44, %46, %cst_57 {dimension_numbers = #tpu.dot_dimension_numbers<[1], [0], [0], [1], [0, 0, 1, 1], [], []>} : vector<64x4xbf16>, vector<4x8xbf16>, vector<64x8xf32> -> vector<64x8xf32>
    %48 = arith.addf %42, %47 : vector<64x8xf32>
    %c1_58 = arith.constant 1 : index
    %c2_59 = arith.constant 2 : index
    %c0_60 = arith.constant 0 : index
    %49 = vector.load %arg9[%c1_58, %c2_59, %c0_60] : memref<6x18x4xbf16, #tpu.memory_space<vmem>>, vector<4x16x4xbf16>
    %50 = vector.shape_cast %49 : vector<4x16x4xbf16> to vector<64x4xbf16>
    %c5_61 = arith.constant 5 : index
    %c0_62 = arith.constant 0 : index
    %c0_63 = arith.constant 0 : index
    %51 = vector.load %arg5[%c5_61, %c0_62, %c0_63] : memref<9x4x8xbf16, #tpu.memory_space<vmem>>, vector<1x4x8xbf16>
    %52 = vector.shape_cast %51 : vector<1x4x8xbf16> to vector<4x8xbf16>
    %cst_64 = arith.constant dense<0.000000e+00> : vector<64x8xf32>
    %53 = tpu.matmul %50, %52, %cst_64 {dimension_numbers = #tpu.dot_dimension_numbers<[1], [0], [0], [1], [0, 0, 1, 1], [], []>} : vector<64x4xbf16>, vector<4x8xbf16>, vector<64x8xf32> -> vector<64x8xf32>
    %54 = arith.addf %48, %53 : vector<64x8xf32>
    %c2_65 = arith.constant 2 : index
    %c0_66 = arith.constant 0 : index
    %c0_67 = arith.constant 0 : index
    %55 = vector.load %arg9[%c2_65, %c0_66, %c0_67] : memref<6x18x4xbf16, #tpu.memory_space<vmem>>, vector<4x16x4xbf16>
    %56 = vector.shape_cast %55 : vector<4x16x4xbf16> to vector<64x4xbf16>
    %c6 = arith.constant 6 : index
    %c0_68 = arith.constant 0 : index
    %c0_69 = arith.constant 0 : index
    %57 = vector.load %arg5[%c6, %c0_68, %c0_69] : memref<9x4x8xbf16, #tpu.memory_space<vmem>>, vector<1x4x8xbf16>
    %58 = vector.shape_cast %57 : vector<1x4x8xbf16> to vector<4x8xbf16>
    %cst_70 = arith.constant dense<0.000000e+00> : vector<64x8xf32>
    %59 = tpu.matmul %56, %58, %cst_70 {dimension_numbers = #tpu.dot_dimension_numbers<[1], [0], [0], [1], [0, 0, 1, 1], [], []>} : vector<64x4xbf16>, vector<4x8xbf16>, vector<64x8xf32> -> vector<64x8xf32>
    %60 = arith.addf %54, %59 : vector<64x8xf32>
    %c2_71 = arith.constant 2 : index
    %c1_72 = arith.constant 1 : index
    %c0_73 = arith.constant 0 : index
    %61 = vector.load %arg9[%c2_71, %c1_72, %c0_73] : memref<6x18x4xbf16, #tpu.memory_space<vmem>>, vector<4x16x4xbf16>
    %62 = vector.shape_cast %61 : vector<4x16x4xbf16> to vector<64x4xbf16>
    %c7 = arith.constant 7 : index
    %c0_74 = arith.constant 0 : index
    %c0_75 = arith.constant 0 : index
    %63 = vector.load %arg5[%c7, %c0_74, %c0_75] : memref<9x4x8xbf16, #tpu.memory_space<vmem>>, vector<1x4x8xbf16>
    %64 = vector.shape_cast %63 : vector<1x4x8xbf16> to vector<4x8xbf16>
    %cst_76 = arith.constant dense<0.000000e+00> : vector<64x8xf32>
    %65 = tpu.matmul %62, %64, %cst_76 {dimension_numbers = #tpu.dot_dimension_numbers<[1], [0], [0], [1], [0, 0, 1, 1], [], []>} : vector<64x4xbf16>, vector<4x8xbf16>, vector<64x8xf32> -> vector<64x8xf32>
    %66 = arith.addf %60, %65 : vector<64x8xf32>
    %c2_77 = arith.constant 2 : index
    %c2_78 = arith.constant 2 : index
    %c0_79 = arith.constant 0 : index
    %67 = vector.load %arg9[%c2_77, %c2_78, %c0_79] : memref<6x18x4xbf16, #tpu.memory_space<vmem>>, vector<4x16x4xbf16>
    %68 = vector.shape_cast %67 : vector<4x16x4xbf16> to vector<64x4xbf16>
    %c8 = arith.constant 8 : index
    %c0_80 = arith.constant 0 : index
    %c0_81 = arith.constant 0 : index
    %69 = vector.load %arg5[%c8, %c0_80, %c0_81] : memref<9x4x8xbf16, #tpu.memory_space<vmem>>, vector<1x4x8xbf16>
    %70 = vector.shape_cast %69 : vector<1x4x8xbf16> to vector<4x8xbf16>
    %cst_82 = arith.constant dense<0.000000e+00> : vector<64x8xf32>
    %71 = tpu.matmul %68, %70, %cst_82 {dimension_numbers = #tpu.dot_dimension_numbers<[1], [0], [0], [1], [0, 0, 1, 1], [], []>} : vector<64x4xbf16>, vector<4x8xbf16>, vector<64x8xf32> -> vector<64x8xf32>
    %72 = arith.addf %66, %71 : vector<64x8xf32>
    %c0_83 = arith.constant 0 : index
    %c0_84 = arith.constant 0 : index
    %73 = vector.load %arg6[%c0_83, %c0_84] : memref<1x8xf32, #tpu.memory_space<vmem>>, vector<1x8xf32>
    %74 = vector.broadcast %73 : vector<1x8xf32> to vector<64x8xf32>
    %75 = arith.mulf %72, %74 : vector<64x8xf32>
    %c0_85 = arith.constant 0 : index
    %c0_86 = arith.constant 0 : index
    %76 = vector.load %arg7[%c0_85, %c0_86] : memref<1x8xf32, #tpu.memory_space<vmem>>, vector<1x8xf32>
    %77 = vector.broadcast %76 : vector<1x8xf32> to vector<64x8xf32>
    %78 = arith.addf %75, %77 : vector<64x8xf32>
    %cst_87 = arith.constant 0.000000e+00 : f32
    %79 = vector.broadcast %cst_87 : f32 to vector<64x8xf32>
    %80 = arith.maximumf %78, %79 : vector<64x8xf32>
    %81 = vector.shape_cast %80 : vector<64x8xf32> to vector<4x16x8xf32>
    %82 = arith.truncf %81 : vector<4x16x8xf32> to vector<4x16x8xbf16>
    %c0_88 = arith.constant 0 : index
    %c0_89 = arith.constant 0 : index
    %c0_90 = arith.constant 0 : index
    %c0_91 = arith.constant 0 : index
    %83 = vector.load %arg8[%c0_88, %c0_89, %c0_90, %c0_91] : memref<1x4x16x8xbf16, #tpu.memory_space<vmem>>, vector<1x4x16x8xbf16>
    %84 = vector.shape_cast %83 : vector<1x4x16x8xbf16> to vector<4x16x8xbf16>
    %85 = vector.shape_cast %82 : vector<4x16x8xbf16> to vector<1x4x16x8xbf16>
    tpu.vector_store %arg8[%c0_88, %c0_89, %c0_90, %c0_91], %85 {strides = array<i32>} : memref<1x4x16x8xbf16, #tpu.memory_space<vmem>>, vector<1x4x16x8xbf16>,
    return
  }
  func.func @transform_0(%arg0: i32, %arg1: i32) -> (i32, i32, i32, i32) {
    %c0_i32 = arith.constant 0 : i32
    %c0_i32_0 = arith.constant 0 : i32
    %c0_i32_1 = arith.constant 0 : i32
    return %arg0, %arg1, %c0_i32, %c0_i32_0 : i32, i32, i32, i32
  }
  func.func @transform_1(%arg0: i32, %arg1: i32) -> (i32, i32, i32, i32) {
    %c4_i32 = arith.constant 4 : i32
    %0 = arith.muli %arg1, %c4_i32 : i32
    %c1_i32 = arith.constant 1 : i32
    %1 = arith.subi %0, %c1_i32 : i32
    %c0_i32 = arith.constant 0 : i32
    %2 = arith.maxsi %1, %c0_i32 : i32
    %c0_i32_0 = arith.constant 0 : i32
    %c0_i32_1 = arith.constant 0 : i32
    %c0_i32_2 = arith.constant 0 : i32
    return %arg0, %2, %c0_i32_0, %c0_i32_1 : i32, i32, i32, i32
  }
  func.func @transform_2(%arg0: i32, %arg1: i32) -> (i32, i32, i32, i32) {
    %c4_i32 = arith.constant 4 : i32
    %0 = arith.muli %arg1, %c4_i32 : i32
    %c4_i32_0 = arith.constant 4 : i32
    %1 = arith.addi %0, %c4_i32_0 : i32
    %c15_i32 = arith.constant 15 : i32
    %2 = arith.minsi %1, %c15_i32 : i32
    %c0_i32 = arith.constant 0 : i32
    %c0_i32_1 = arith.constant 0 : i32
    %c0_i32_2 = arith.constant 0 : i32
    return %arg0, %2, %c0_i32, %c0_i32_1 : i32, i32, i32, i32
  }
  func.func @transform_3(%arg0: i32, %arg1: i32) -> (i32, i32, i32) {
    %c0_i32 = arith.constant 0 : i32
    %c0_i32_0 = arith.constant 0 : i32
    %c0_i32_1 = arith.constant 0 : i32
    %c0_i32_2 = arith.constant 0 : i32
    return %c0_i32, %c0_i32_0, %c0_i32_1 : i32, i32, i32
  }
  func.func @transform_4(%arg0: i32, %arg1: i32) -> (i32, i32) {
    %c0_i32 = arith.constant 0 : i32
    %c0_i32_0 = arith.constant 0 : i32
    %c0_i32_1 = arith.constant 0 : i32
    return %c0_i32, %c0_i32_0 : i32, i32
  }
  func.func @transform_5(%arg0: i32, %arg1: i32) -> (i32, i32) {
    %c0_i32 = arith.constant 0 : i32
    %c0_i32_0 = arith.constant 0 : i32
    %c0_i32_1 = arith.constant 0 : i32
    return %c0_i32, %c0_i32_0 : i32, i32
  }
  func.func @transform_6(%arg0: i32, %arg1: i32) -> (i32, i32, i32, i32) {
    %c0_i32 = arith.constant 0 : i32
    %c0_i32_0 = arith.constant 0 : i32
    %c0_i32_1 = arith.constant 0 : i32
    return %arg0, %arg1, %c0_i32, %c0_i32_0 : i32, i32, i32, i32
  }
}

</mosaic_0001>

<llo_original>
// kernel: tpu_custom_call.1
$region0: #{tpu_custom_call.1}
  #allocation0 [shape = 'u32[]', space=smem, size = 0x4, offset = 0x4, fixed_abs, tag = 'smem constant byte address 0x4 - core index']
  #allocation1 [shape = 'u32[144,128]{1,0:T(1,128)}', space=vmem, size = 0x12000, scoped, tag = 'internal scratch']
  #allocation2 [shape = 'bf16[6,18,4]{2,1,0:T(8,128)(2,1)}', space=vmem, size = 0x9000, scoped, tag = 'scratch operand']
  %s0 = inlined_call_operand.vmem [shape: bf16[2,16,16,4], index: 0, kind: input, shape index: {}]
  %s1 = inlined_call_operand.vmem [shape: bf16[2,16,16,4], index: 1, kind: input, shape index: {}]
  %s2 = inlined_call_operand.vmem [shape: bf16[2,16,16,4], index: 2, kind: input, shape index: {}]
  %s3 = inlined_call_operand.vmem [shape: bf16[9,4,8], index: 3, kind: input, shape index: {}]
  %s4 = inlined_call_operand.vmem [shape: f32[1,8], index: 4, kind: input, shape index: {}]
  %s5 = inlined_call_operand.vmem [shape: f32[1,8], index: 5, kind: input, shape index: {}]
  %s6 = inlined_call_operand.vmem [shape: bf16[2,16,16,8], index: 6, kind: output, shape index: {}]
  %s7 = sld [smem:[#allocation0]]
  $region57: #{tpu_custom_call.1} parent=0
    _
  %s9 = ssub.s32 1, %s7
  %s10 = scalar_select 0, %s9, %s7
  loop: start=0, step=1, limit=10
  $region2: #{tpu_custom_call.1} parent=0 // loop_pre_header
    _
  $region3: #{tpu_custom_call.1} parent=0 // loop_header
    %s12 = sphi 0, %s16
    %p13 = scmp.ge.s32.totalorder %s12, 10
    %s19 = sphi 0, %s31
    %s20 = sphi 0, %s27
    %s21 = sphi 0, %s19
    %s22 = sphi 0, %s20
    %s23 = sphi 0, %s21
    %s24 = sphi 0, %s22
    %s36 = sphi 0, %s38
    %s39 = sphi 0, %s36
    %s40 = sphi 0, %s39
    %s56 = sphi 0, %s40
    %s72 = sphi 0, %s74
    %s75 = sphi 0, %s72
    %s76 = sphi 0, %s75
    %s92 = sphi 0, %s76
    %s108 = sphi 0, %s110
    %s111 = sphi 0, %s108
    %s112 = sphi 0, %s111
    %s128 = sphi 0, %s112
    %s132 = sphi 0, %s132
    %s134 = sphi 0, %s132
    %s135 = sphi 0, %s134
    %s149 = sphi 0, %s135
    %s153 = sphi 0, %s153
    %s155 = sphi 0, %s153
    %s156 = sphi 0, %s155
    %s170 = sphi 0, %s156
    %s174 = sphi 0, %s174
    %s176 = sphi 0, %s174
    %s177 = sphi 0, %s176
    %s191 = sphi 0, %s177
    %s199 = sphi 0, %s201
    %s202 = sphi 0, %s199
    %s203 = sphi 0, %s202
    %s219 = sphi 0, %s203
  $region4: #{tpu_custom_call.1} parent=0 // loop_header_branch
    %15 = sbr.rel (%p13) target = $region8
  $region5: #{tpu_custom_call.1} parent=0 // loop_body
    %s17 = ssub.s32 %s12, 1
    %s18 = ssub.s32 %s12, 2
    %s25 = sadd.s32 1, %s20
    %p26 = scmp.ge.s32.totalorder %s25, 4
    %s27 = scalar_select %p26, 0, %s25
    %s28 = sadd.s32 1, %s19
    %s29 = scalar_select %p26, %s28, %s19
    %p30 = scmp.ge.s32.totalorder %s29, 2
    %s31 = scalar_select %p30, 0, %s29
    %s32 = ssub.s32 %s19, %s31
    %s33 = ssub.s32 %s20, %s27
    %s34 = sor.u32 %s32, %s33
    %p35 = scmp.eq.s32.totalorder %s34, 0
    %s37 = sadd.s32 %s36, 1
    %s38 = scalar_select %p35, %s36, %s37
    %p41 = pneg %p35
    %p42 = scmp.eq.s32.totalorder %s12, 7
    %p43 = por %p41, %p42
    %p44 = scmp.ne.s32.totalorder %s36, %s39
    %p45 = scmp.eq.s32.totalorder %s12, 0
    %p46 = por %p44, %p45
    %p47 = scmp.ne.s32.totalorder %s36, %s39
    %p48 = scmp.eq.s32.totalorder %s17, 7
    %p49 = por %p47, %p48
    %p50 = scmp.ne.s32.totalorder %s39, %s40
    %p51 = scmp.eq.s32.totalorder %s17, 0
    %p52 = por %p50, %p51
    %p53 = scmp.ne.s32.totalorder %s39, %s40
    %p54 = scmp.eq.s32.totalorder %s18, 7
    %p55 = por %p53, %p54
    %p57 = scmp.ne.s32.totalorder %s40, %s56
    %p58 = scmp.eq.s32.totalorder %s18, 0
    %p59 = por %p57, %p58
    %s60 = smul.u32 %s20, 4
    %s61 = ssub.s32 %s60, 1
    %p62 = scmp.gt.s32.totalorder %s61, 0
    %s63 = scalar_select %p62, %s61, 0
    %s64 = smul.u32 %s27, 4
    %s65 = ssub.s32 %s64, 1
    %p66 = scmp.gt.s32.totalorder %s65, 0
    %s67 = scalar_select %p66, %s65, 0
    %s68 = ssub.s32 %s19, %s31
    %s69 = ssub.s32 %s63, %s67
    %s70 = sor.u32 %s68, %s69
    %p71 = scmp.eq.s32.totalorder %s70, 0
    %s73 = sadd.s32 %s72, 1
    %s74 = scalar_select %p71, %s72, %s73
    %p77 = pneg %p71
    %p78 = scmp.eq.s32.totalorder %s12, 7
    %p79 = por %p77, %p78
    %p80 = scmp.ne.s32.totalorder %s72, %s75
    %p81 = scmp.eq.s32.totalorder %s12, 0
    %p82 = por %p80, %p81
    %p83 = scmp.ne.s32.totalorder %s72, %s75
    %p84 = scmp.eq.s32.totalorder %s17, 7
    %p85 = por %p83, %p84
    %p86 = scmp.ne.s32.totalorder %s75, %s76
    %p87 = scmp.eq.s32.totalorder %s17, 0
    %p88 = por %p86, %p87
    %p89 = scmp.ne.s32.totalorder %s75, %s76
    %p90 = scmp.eq.s32.totalorder %s18, 7
    %p91 = por %p89, %p90
    %p93 = scmp.ne.s32.totalorder %s76, %s92
    %p94 = scmp.eq.s32.totalorder %s18, 0
    %p95 = por %p93, %p94
    %s96 = smul.u32 %s20, 4
    %s97 = sadd.s32 %s96, 4
    %p98 = scmp.lt.s32.totalorder %s97, 15
    %s99 = scalar_select %p98, %s97, 15
    %s100 = smul.u32 %s27, 4
    %s101 = sadd.s32 %s100, 4
    %p102 = scmp.lt.s32.totalorder %s101, 15
    %s103 = scalar_select %p102, %s101, 15
    %s104 = ssub.s32 %s19, %s31
    %s105 = ssub.s32 %s99, %s103
    %s106 = sor.u32 %s104, %s105
    %p107 = scmp.eq.s32.totalorder %s106, 0
    %s109 = sadd.s32 %s108, 1
    %s110 = scalar_select %p107, %s108, %s109
    %p113 = pneg %p107
    %p114 = scmp.eq.s32.totalorder %s12, 7
    %p115 = por %p113, %p114
    %p116 = scmp.ne.s32.totalorder %s108, %s111
    %p117 = scmp.eq.s32.totalorder %s12, 0
    %p118 = por %p116, %p117
    %p119 = scmp.ne.s32.totalorder %s108, %s111
    %p120 = scmp.eq.s32.totalorder %s17, 7
    %p121 = por %p119, %p120
    %p122 = scmp.ne.s32.totalorder %s111, %s112
    %p123 = scmp.eq.s32.totalorder %s17, 0
    %p124 = por %p122, %p123
    %p125 = scmp.ne.s32.totalorder %s111, %s112
    %p126 = scmp.eq.s32.totalorder %s18, 7
    %p127 = por %p125, %p126
    %p129 = scmp.ne.s32.totalorder %s112, %s128
    %p130 = scmp.eq.s32.totalorder %s18, 0
    %p131 = por %p129, %p130
    %s133 = sadd.s32 %s132, 1
    %p136 = scmp.eq.s32.totalorder %s12, 7
    %p137 = scmp.ne.s32.totalorder %s132, %s134
    %p138 = scmp.eq.s32.totalorder %s12, 0
    %p139 = por %p137, %p138
    %p140 = scmp.ne.s32.totalorder %s132, %s134
    %p141 = scmp.eq.s32.totalorder %s17, 7
    %p142 = por %p140, %p141
    %p143 = scmp.ne.s32.totalorder %s134, %s135
    %p144 = scmp.eq.s32.totalorder %s17, 0
    %p145 = por %p143, %p144
    %p146 = scmp.ne.s32.totalorder %s134, %s135
    %p147 = scmp.eq.s32.totalorder %s18, 7
    %p148 = por %p146, %p147
    %p150 = scmp.ne.s32.totalorder %s135, %s149
    %p151 = scmp.eq.s32.totalorder %s18, 0
    %p152 = por %p150, %p151
    %s154 = sadd.s32 %s153, 1
    %p157 = scmp.eq.s32.totalorder %s12, 7
    %p158 = scmp.ne.s32.totalorder %s153, %s155
    %p159 = scmp.eq.s32.totalorder %s12, 0
    %p160 = por %p158, %p159
    %p161 = scmp.ne.s32.totalorder %s153, %s155
    %p162 = scmp.eq.s32.totalorder %s17, 7
    %p163 = por %p161, %p162
    %p164 = scmp.ne.s32.totalorder %s155, %s156
    %p165 = scmp.eq.s32.totalorder %s17, 0
    %p166 = por %p164, %p165
    %p167 = scmp.ne.s32.totalorder %s155, %s156
    %p168 = scmp.eq.s32.totalorder %s18, 7
    %p169 = por %p167, %p168
    %p171 = scmp.ne.s32.totalorder %s156, %s170
    %p172 = scmp.eq.s32.totalorder %s18, 0
    %p173 = por %p171, %p172
    %s175 = sadd.s32 %s174, 1
    %p178 = scmp.eq.s32.totalorder %s12, 7
    %p179 = scmp.ne.s32.totalorder %s174, %s176
    %p180 = scmp.eq.s32.totalorder %s12, 0
    %p181 = por %p179, %p180
    %p182 = scmp.ne.s32.totalorder %s174, %s176
    %p183 = scmp.eq.s32.totalorder %s17, 7
    %p184 = por %p182, %p183
    %p185 = scmp.ne.s32.totalorder %s176, %s177
    %p186 = scmp.eq.s32.totalorder %s17, 0
    %p187 = por %p185, %p186
    %p188 = scmp.ne.s32.totalorder %s176, %s177
    %p189 = scmp.eq.s32.totalorder %s18, 7
    %p190 = por %p188, %p189
    %p192 = scmp.ne.s32.totalorder %s177, %s191
    %p193 = scmp.eq.s32.totalorder %s18, 0
    %p194 = por %p192, %p193
    %s195 = ssub.s32 %s19, %s31
    %s196 = ssub.s32 %s20, %s27
    %s197 = sor.u32 %s195, %s196
    %p198 = scmp.eq.s32.totalorder %s197, 0
    %s200 = sadd.s32 %s199, 1
    %s201 = scalar_select %p198, %s199, %s200
    %p204 = pneg %p198
    %p205 = scmp.eq.s32.totalorder %s12, 7
    %p206 = por %p204, %p205
    %p207 = scmp.ne.s32.totalorder %s199, %s202
    %p208 = scmp.eq.s32.totalorder %s12, 0
    %p209 = por %p207, %p208
    %p210 = scmp.ne.s32.totalorder %s199, %s202
    %p211 = scmp.eq.s32.totalorder %s17, 7
    %p212 = por %p210, %p211
    %p213 = scmp.ne.s32.totalorder %s202, %s203
    %p214 = scmp.eq.s32.totalorder %s17, 0
    %p215 = por %p213, %p214
    %p216 = scmp.ne.s32.totalorder %s202, %s203
    %p217 = scmp.eq.s32.totalorder %s18, 7
    %p218 = por %p216, %p217
    %p220 = scmp.ne.s32.totalorder %s203, %s219
    %p221 = scmp.eq.s32.totalorder %s18, 0
    %p222 = por %p220, %p221
    %p223 = scmp.le.s32.totalorder 1, %s12
    %p224 = scmp.lt.s32.totalorder %s12, 9
    %p225 = pnand %p223, %p224
    %p226 = pneg %p225
    // Predicated region
    $region9: #{tpu_custom_call.1} parent=5 // pred_check
      _
    $region10: #{tpu_custom_call.1} parent=5 // pred_check_branch
      %228 = sbr.rel (%p225) target = $region12
    $region11: #{tpu_custom_call.1} parent=5 // pred_region
      %s229 = ssub.s32 %s12, 1
      // Predicated region
      $region13: #{tpu_custom_call.1} parent=11 // pred_check
        %p230 = pneg %p145
      $region14: #{tpu_custom_call.1} parent=11 // pred_check_branch
        %232 = sbr.rel (%p230) target = $region16
      $region15: #{tpu_custom_call.1} parent=11 // pred_region
        _
      $region16: #{tpu_custom_call.1} parent=11 // pred_fallthru
        _
      // Predicated region
      $region17: #{tpu_custom_call.1} parent=11 // pred_check
        %p233 = pneg %p166
      $region18: #{tpu_custom_call.1} parent=11 // pred_check_branch
        %235 = sbr.rel (%p233) target = $region20
      $region19: #{tpu_custom_call.1} parent=11 // pred_region
        _
      $region20: #{tpu_custom_call.1} parent=11 // pred_fallthru
        _
      // Predicated region
      $region21: #{tpu_custom_call.1} parent=11 // pred_check
        %p236 = pneg %p187
      $region22: #{tpu_custom_call.1} parent=11 // pred_check_branch
        %238 = sbr.rel (%p236) target = $region24
      $region23: #{tpu_custom_call.1} parent=11 // pred_region
        _
      $region24: #{tpu_custom_call.1} parent=11 // pred_fallthru
        _
    $region12: #{tpu_custom_call.1} parent=5 // pred_fallthru
      _
    %p239 = scmp.lt.s32.totalorder %s12, 8
    // Predicated region
    $region25: #{tpu_custom_call.1} parent=5 // pred_check
      %p240 = pneg %p239
    $region26: #{tpu_custom_call.1} parent=5 // pred_check_branch
      %242 = sbr.rel (%p240) target = $region28
    $region27: #{tpu_custom_call.1} parent=5 // pred_region
      // Predicated region
      $region29: #{tpu_custom_call.1} parent=27 // pred_check
        %p243 = pneg %p46
      $region30: #{tpu_custom_call.1} parent=27 // pred_check_branch
        %245 = sbr.rel (%p243) target = $region32
      $region31: #{tpu_custom_call.1} parent=27 // pred_region
        %s246 = smul.u32 4, %s20
        %p247 = scmp.lt.s32.totalorder %s19, 1
        %s248 = scalar_select %p247, %s19, 1
        %p249 = scmp.lt.s32.totalorder %s246, 15
        %s250 = scalar_select %p249, %s246, 15
        %s251 = smul.addr %s250, 2
        %s252 = smul.addr %s248, 32
        %s253 = sadd.s32 %s251, %s252
        %s254 = smul.addr %s253, 4
        %s255 = scalar_lea.vmem %s0, %s254
        %s256 = smul.u32 4, %s20
      $region32: #{tpu_custom_call.1} parent=27 // pred_fallthru
        _
      // Predicated region
      $region33: #{tpu_custom_call.1} parent=27 // pred_check
        %p257 = pneg %p82
      $region34: #{tpu_custom_call.1} parent=27 // pred_check_branch
        %259 = sbr.rel (%p257) target = $region36
      $region35: #{tpu_custom_call.1} parent=27 // pred_region
        %s260 = smul.u32 %s20, 4
        %s261 = ssub.s32 %s260, 1
        %p262 = scmp.gt.s32.totalorder %s261, 0
        %s263 = scalar_select %p262, %s261, 0
        %p264 = scmp.lt.s32.totalorder %s19, 1
        %s265 = scalar_select %p264, %s19, 1
        %p266 = scmp.lt.s32.totalorder %s263, 15
        %s267 = scalar_select %p266, %s263, 15
        %s268 = smul.addr %s267, 2
        %s269 = smul.addr %s265, 32
        %s270 = sadd.s32 %s268, %s269
        %s271 = smul.addr %s270, 4
        %s272 = scalar_lea.vmem %s1, %s271
        %s273 = smul.u32 %s20, 4
        %s274 = ssub.s32 %s273, 1
        %p275 = scmp.gt.s32.totalorder %s274, 0
        %s276 = scalar_select %p275, %s274, 0
      $region36: #{tpu_custom_call.1} parent=27 // pred_fallthru
        _
      // Predicated region
      $region37: #{tpu_custom_call.1} parent=27 // pred_check
        %p277 = pneg %p118
      $region38: #{tpu_custom_call.1} parent=27 // pred_check_branch
        %279 = sbr.rel (%p277) target = $region40
      $region39: #{tpu_custom_call.1} parent=27 // pred_region
        %s280 = smul.u32 %s20, 4
        %s281 = sadd.s32 %s280, 4
        %p282 = scmp.lt.s32.totalorder %s281, 15
        %s283 = scalar_select %p282, %s281, 15
        %p284 = scmp.lt.s32.totalorder %s19, 1
        %s285 = scalar_select %p284, %s19, 1
        %p286 = scmp.lt.s32.totalorder %s283, 15
        %s287 = scalar_select %p286, %s283, 15
        %s288 = smul.addr %s287, 2
        %s289 = smul.addr %s285, 32
        %s290 = sadd.s32 %s288, %s289
        %s291 = smul.addr %s290, 4
        %s292 = scalar_lea.vmem %s2, %s291
        %s293 = smul.u32 %s20, 4
        %s294 = sadd.s32 %s293, 4
        %p295 = scmp.lt.s32.totalorder %s294, 15
        %s296 = scalar_select %p295, %s294, 15
      $region40: #{tpu_custom_call.1} parent=27 // pred_fallthru
        _
    $region28: #{tpu_custom_call.1} parent=5 // pred_fallthru
      _
    %p297 = scmp.le.s32.totalorder 1, %s12
    %p298 = scmp.lt.s32.totalorder %s12, 9
    %p299 = pnand %p297, %p298
    %p300 = pneg %p299
    // Predicated region
    $region41: #{tpu_custom_call.1} parent=5 // pred_check
      _
    $region42: #{tpu_custom_call.1} parent=5 // pred_check_branch
      %302 = sbr.rel (%p299) target = $region44
    $region43: #{tpu_custom_call.1} parent=5 // pred_region
      %s303 = ssub.s32 %s12, 1
      %s304 = smul.u32 4, %s22
      %p305 = scmp.lt.s32.totalorder %s21, 1
      %s306 = scalar_select %p305, %s21, 1
      %p307 = scmp.lt.s32.totalorder %s304, 15
      %s308 = scalar_select %p307, %s304, 15
      %s309 = smul.addr %s308, 2
      %s310 = smul.addr %s306, 32
      %s311 = sadd.s32 %s309, %s310
      %s312 = smul.addr %s311, 4
      %s313 = scalar_lea.vmem %s0, %s312
      %p314 = pneg %p52
      %p315 = pneg %p49
      %s316 = smul.u32 %s22, 4
      %s317 = ssub.s32 %s316, 1
      %p318 = scmp.gt.s32.totalorder %s317, 0
      %s319 = scalar_select %p318, %s317, 0
      %p320 = scmp.lt.s32.totalorder %s21, 1
      %s321 = scalar_select %p320, %s21, 1
      %p322 = scmp.lt.s32.totalorder %s319, 15
      %s323 = scalar_select %p322, %s319, 15
      %s324 = smul.addr %s323, 2
      %s325 = smul.addr %s321, 32
      %s326 = sadd.s32 %s324, %s325
      %s327 = smul.addr %s326, 4
      %s328 = scalar_lea.vmem %s1, %s327
      %p329 = pneg %p88
      %p330 = pneg %p85
      %s331 = smul.u32 %s22, 4
      %s332 = sadd.s32 %s331, 4
      %p333 = scmp.lt.s32.totalorder %s332, 15
      %s334 = scalar_select %p333, %s332, 15
      %p335 = scmp.lt.s32.totalorder %s21, 1
      %s336 = scalar_select %p335, %s21, 1
      %p337 = scmp.lt.s32.totalorder %s334, 15
      %s338 = scalar_select %p337, %s334, 15
      %s339 = smul.addr %s338, 2
      %s340 = smul.addr %s336, 32
      %s341 = sadd.s32 %s339, %s340
      %s342 = smul.addr %s341, 4
      %s343 = scalar_lea.vmem %s2, %s342
      %p344 = pneg %p124
      %p345 = pneg %p121
      %p346 = pneg %p145
      %p347 = pneg %p142
      %p348 = pneg %p166
      %p349 = pneg %p163
      %p350 = pneg %p187
      %p351 = pneg %p184
      %p352 = pneg %p215
      %p353 = pneg %p212
      %s354 = smul.u32 4, %s22
      %p355 = scmp.lt.s32.totalorder %s21, 1
      %s356 = scalar_select %p355, %s21, 1
      %p357 = scmp.lt.s32.totalorder %s354, 15
      %s358 = scalar_select %p357, %s354, 15
      %s359 = smul.addr %s358, 2
      %s360 = smul.addr %s356, 32
      %s361 = sadd.s32 %s359, %s360
      %s362 = smul.addr %s361, 4
      %s363 = scalar_lea.vmem %s6, %s362
      %s364 = smul.u32 4, %s22
      %p365 = scmp.lt.s32.totalorder %s21, 1
      %s366 = scalar_select %p365, %s21, 1
      %p367 = scmp.lt.s32.totalorder %s364, 15
      %s368 = scalar_select %p367, %s364, 15
      %s369 = smul.addr %s368, 2
      %s370 = smul.addr %s366, 32
      %s371 = sadd.s32 %s369, %s370
      %s372 = smul.addr %s371, 4
      %s373 = scalar_lea.vmem %s0, %s372
      %s374 = smul.u32 4, %s22
      %s375 = smul.u32 %s22, 4
      %s376 = ssub.s32 %s375, 1
      %p377 = scmp.gt.s32.totalorder %s376, 0
      %s378 = scalar_select %p377, %s376, 0
      %p379 = scmp.lt.s32.totalorder %s21, 1
      %s380 = scalar_select %p379, %s21, 1
      %p381 = scmp.lt.s32.totalorder %s378, 15
      %s382 = scalar_select %p381, %s378, 15
      %s383 = smul.addr %s382, 2
      %s384 = smul.addr %s380, 32
      %s385 = sadd.s32 %s383, %s384
      %s386 = smul.addr %s385, 4
      %s387 = scalar_lea.vmem %s1, %s386
      %s388 = smul.u32 %s22, 4
      %s389 = ssub.s32 %s388, 1
      %p390 = scmp.gt.s32.totalorder %s389, 0
      %s391 = scalar_select %p390, %s389, 0
      %s392 = smul.u32 %s22, 4
      %s393 = sadd.s32 %s392, 4
      %p394 = scmp.lt.s32.totalorder %s393, 15
      %s395 = scalar_select %p394, %s393, 15
      %p396 = scmp.lt.s32.totalorder %s21, 1
      %s397 = scalar_select %p396, %s21, 1
      %p398 = scmp.lt.s32.totalorder %s395, 15
      %s399 = scalar_select %p398, %s395, 15
      %s400 = smul.addr %s399, 2
      %s401 = smul.addr %s397, 32
      %s402 = sadd.s32 %s400, %s401
      %s403 = smul.addr %s402, 4
      %s404 = scalar_lea.vmem %s2, %s403
      %s405 = smul.u32 %s22, 4
      %s406 = sadd.s32 %s405, 4
      %p407 = scmp.lt.s32.totalorder %s406, 15
      %s408 = scalar_select %p407, %s406, 15
      %s409 = smul.u32 4, %s22
      %p410 = scmp.lt.s32.totalorder %s21, 1
      %s411 = scalar_select %p410, %s21, 1
      %p412 = scmp.lt.s32.totalorder %s409, 15
      %s413 = scalar_select %p412, %s409, 15
      %s414 = smul.addr %s413, 2
      %s415 = smul.addr %s411, 32
      %s416 = sadd.s32 %s414, %s415
      %s417 = smul.addr %s416, 4
      %s418 = scalar_lea.vmem %s6, %s417
      %s419 = smul.u32 4, %s22
      %v421 = vld [vmem:[%s373] sm:$0xf]
      %v422 = vld [vmem:[%s373 + $0x4] sm:$0xf]
      %v423 = vld [vmem:[%s373 + $0x8] sm:$0xf]
      %v424 = vld [vmem:[%s373 + $0xc] sm:$0xf]
      %v425 = vld [vmem:[%s373 + $0x10] sm:$0xf]
      %v426 = vld [vmem:[%s373 + $0x14] sm:$0xf]
      %v427 = vld [vmem:[%s373 + $0x18] sm:$0xf]
      %v428 = vld [vmem:[%s373 + $0x1c] sm:$0xf]
      %vm429 = vsmask.f32 256
      %vm430 = vsmask.f32 4368
      %vm431 = vmor %vm429, %vm430
      %v433 = vshrl.u32 %v421, 16
      %v435 = vrot.slane %v433, 7
      %v436 = vshll.u32 %v421, 16
      %v438 = vor.u32 %v435, %v436
      %v439 = vrot.slane %v435, 4
      %v441 = vshrl.u32 %v422, 16
      %v443 = vrot.slane %v441, 7
      %v444 = vshll.u32 %v422, 16
      %v446 = vor.u32 %v443, %v444
      %v447 = vsel %vm431, %v439, %v446
      %v448 = vrot.slane %v443, 4
      %v450 = vshrl.u32 %v423, 16
      %v452 = vrot.slane %v450, 7
      %v453 = vshll.u32 %v423, 16
      %v455 = vor.u32 %v452, %v453
      %v456 = vrot.slane %v452, 4
      %v458 = vshrl.u32 %v424, 16
      %v460 = vrot.slane %v458, 7
      %v461 = vshll.u32 %v424, 16
      %v463 = vor.u32 %v460, %v461
      %v464 = vsel %vm431, %v456, %v463
      %v465 = vrot.slane %v460, 4
      %v467 = vshrl.u32 %v425, 16
      %v469 = vrot.slane %v467, 7
      %v470 = vshll.u32 %v425, 16
      %v472 = vor.u32 %v469, %v470
      %v473 = vrot.slane %v469, 4
      %v475 = vshrl.u32 %v426, 16
      %v477 = vrot.slane %v475, 7
      %v478 = vshll.u32 %v426, 16
      %v480 = vor.u32 %v477, %v478
      %v481 = vsel %vm431, %v473, %v480
      %v482 = vrot.slane %v477, 4
      %v484 = vshrl.u32 %v427, 16
      %v486 = vrot.slane %v484, 7
      %v487 = vshll.u32 %v427, 16
      %v489 = vor.u32 %v486, %v487
      %v490 = vrot.slane %v486, 4
      %v492 = vshrl.u32 %v428, 16
      %v494 = vrot.slane %v492, 7
      %v495 = vshll.u32 %v428, 16
      %v497 = vor.u32 %v494, %v495
      %v498 = vsel %vm431, %v490, %v497
      %v499 = vrot.slane %v494, 4
      %s512 = scalar_lea.vmem [#allocation2], 12
      %vm513 = vcmask 27648
      %vm514 = vsmask.f32 7938
      %vm515 = vmand %vm513, %vm514
      %v516 = vld [vmem:[%s512] sm:$0xf]
      %v517 = vsel %vm515, %v438, %v516
      %518 = vst [vmem:[%s512] sm:$0xf] %v517
      %vm519 = vcmask 27648
      %520 = vst.msk [vmem:[%s512 + $0x4] sm:$0xf] %vm519, %v447
      %vm521 = vcmask 24576
      %vm522 = vmand %vm521, %vm429
      %v523 = vld [vmem:[%s512 + $0x8] sm:$0x1]
      %v524 = vsel %vm522, %v448, %v523
      %525 = vst [vmem:[%s512 + $0x8] sm:$0x1] %v524
      %v526 = vld [vmem:[%s512 + $0xc] sm:$0xf]
      %v527 = vsel %vm515, %v455, %v526
      %528 = vst [vmem:[%s512 + $0xc] sm:$0xf] %v527
      %529 = vst.msk [vmem:[%s512 + $0x10] sm:$0xf] %vm519, %v464
      %v530 = vld [vmem:[%s512 + $0x14] sm:$0x1]
      %v531 = vsel %vm522, %v465, %v530
      %532 = vst [vmem:[%s512 + $0x14] sm:$0x1] %v531
      %v533 = vld [vmem:[%s512 + $0x18] sm:$0xf]
      %v534 = vsel %vm515, %v472, %v533
      %535 = vst [vmem:[%s512 + $0x18] sm:$0xf] %v534
      %536 = vst.msk [vmem:[%s512 + $0x1c] sm:$0xf] %vm519, %v481
      %v537 = vld [vmem:[%s512 + $0x20] sm:$0x1]
      %v538 = vsel %vm522, %v482, %v537
      %539 = vst [vmem:[%s512 + $0x20] sm:$0x1] %v538
      %v540 = vld [vmem:[%s512 + $0x24] sm:$0xf]
      %v541 = vsel %vm515, %v489, %v540
      %542 = vst [vmem:[%s512 + $0x24] sm:$0xf] %v541
      %543 = vst.msk [vmem:[%s512 + $0x28] sm:$0xf] %vm519, %v498
      %v544 = vld [vmem:[%s512 + $0x2c] sm:$0x1]
      %v545 = vsel %vm522, %v499, %v544
      %546 = vst [vmem:[%s512 + $0x2c] sm:$0x1] %v545
      %v547 = vld [vmem:[#allocation2] sm:$0x1]
      %v548 = vsel %vm522, 0, %v547
      %549 = vst [vmem:[#allocation2] sm:$0x1] %v548
      %v550 = vld [vmem:[#allocation2 + $0xc] sm:$0x1]
      %v551 = vsel %vm522, 0, %v550
      %552 = vst [vmem:[#allocation2 + $0xc] sm:$0x1] %v551
      %v553 = vld [vmem:[#allocation2 + $0x18] sm:$0x1]
      %v554 = vsel %vm522, 0, %v553
      %555 = vst [vmem:[#allocation2 + $0x18] sm:$0x1] %v554
      %v556 = vld [vmem:[#allocation2 + $0x24] sm:$0x1]
      %v557 = vsel %vm522, 0, %v556
      %558 = vst [vmem:[#allocation2 + $0x24] sm:$0x1] %v557
      %v559 = vld [vmem:[#allocation2 + $0x30] sm:$0x1]
      %v560 = vsel %vm522, 0, %v559
      %561 = vst [vmem:[#allocation2 + $0x30] sm:$0x1] %v560
      %v562 = vld [vmem:[#allocation2 + $0x3c] sm:$0x1]
      %v563 = vsel %vm522, 0, %v562
      %564 = vst [vmem:[#allocation2 + $0x3c] sm:$0x1] %v563
      %vm565 = vmand %vm521, %vm514
      %v566 = vld [vmem:[#allocation2 + $0x8] sm:$0x1]
      %v567 = vsel %vm565, 0, %v566
      %568 = vst [vmem:[#allocation2 + $0x8] sm:$0x1] %v567
      %v569 = vld [vmem:[#allocation2 + $0x14] sm:$0x1]
      %v570 = vsel %vm565, 0, %v569
      %571 = vst [vmem:[#allocation2 + $0x14] sm:$0x1] %v570
      %v572 = vld [vmem:[#allocation2 + $0x20] sm:$0x1]
      %v573 = vsel %vm565, 0, %v572
      %574 = vst [vmem:[#allocation2 + $0x20] sm:$0x1] %v573
      %v575 = vld [vmem:[#allocation2 + $0x2c] sm:$0x1]
      %v576 = vsel %vm565, 0, %v575
      %577 = vst [vmem:[#allocation2 + $0x2c] sm:$0x1] %v576
      %v578 = vld [vmem:[#allocation2 + $0x38] sm:$0x1]
      %v579 = vsel %vm565, 0, %v578
      %580 = vst [vmem:[#allocation2 + $0x38] sm:$0x1] %v579
      %v581 = vld [vmem:[#allocation2 + $0x44] sm:$0x1]
      %v582 = vsel %vm565, 0, %v581
      %583 = vst [vmem:[#allocation2 + $0x44] sm:$0x1] %v582
      %v584 = vld [vmem:[%s387] sm:$0xf]
      %v585 = vld [vmem:[%s387 + $0x4] sm:$0xf]
      %p586 = scmp.gt.s32.totalorder %s22, 0
      %s587 = scalar_select %p586, 1, 0
      %v588 = vstv %s587
      %vm589 = vcmp.eq.s32.totalorder %v588, 1
      %v590 = vsel %vm589, %v584, 0
      %v591 = vsel %vm589, %v585, 0
      %v593 = vshrl.u32 %v590, 16
      %v595 = vrot.slane %v593, 7
      %v596 = vshll.u32 %v590, 16
      %v598 = vor.u32 %v595, %v596
      %v599 = vrot.slane %v595, 4
      %v601 = vshrl.u32 %v591, 16
      %v603 = vrot.slane %v601, 7
      %v604 = vshll.u32 %v591, 16
      %v606 = vor.u32 %v603, %v604
      %v607 = vsel %vm431, %v599, %v606
      %v608 = vrot.slane %v603, 4
      %v612 = vld [vmem:[#allocation2] sm:$0xf]
      %v613 = vsel %vm515, %v598, %v612
      %614 = vst [vmem:[#allocation2] sm:$0xf] %v613
      %615 = vst.msk [vmem:[#allocation2 + $0x4] sm:$0xf] %vm519, %v607
      %v616 = vld [vmem:[#allocation2 + $0x8] sm:$0x1]
      %v617 = vsel %vm522, %v608, %v616
      %618 = vst [vmem:[#allocation2 + $0x8] sm:$0x1] %v617
      %v619 = vld [vmem:[%s404] sm:$0xf]
      %v620 = vld [vmem:[%s404 + $0x4] sm:$0xf]
      %p621 = scmp.lt.s32.totalorder %s22, 3
      %s622 = scalar_select %p621, 1, 0
      %v623 = vstv %s622
      %vm624 = vcmp.eq.s32.totalorder %v623, 1
      %v625 = vsel %vm624, %v619, 0
      %v626 = vsel %vm624, %v620, 0
      %v628 = vshrl.u32 %v625, 16
      %v630 = vrot.slane %v628, 7
      %v631 = vshll.u32 %v625, 16
      %v633 = vor.u32 %v630, %v631
      %v634 = vrot.slane %v630, 4
      %v636 = vshrl.u32 %v626, 16
      %v638 = vrot.slane %v636, 7
      %v639 = vshll.u32 %v626, 16
      %v641 = vor.u32 %v638, %v639
      %v642 = vsel %vm431, %v634, %v641
      %v643 = vrot.slane %v638, 4
      %s647 = scalar_lea.vmem [#allocation2], 60
      %v648 = vld [vmem:[%s647] sm:$0xf]
      %v649 = vsel %vm515, %v633, %v648
      %650 = vst [vmem:[%s647] sm:$0xf] %v649
      %651 = vst.msk [vmem:[%s647 + $0x4] sm:$0xf] %vm519, %v642
      %v652 = vld [vmem:[%s647 + $0x8] sm:$0x1]
      %v653 = vsel %vm522, %v643, %v652
      %654 = vst [vmem:[%s647 + $0x8] sm:$0x1] %v653
      %v655 = vld [vmem:[#allocation2] sm:$0xf]
      %v656 = vld [vmem:[#allocation2 + $0x4] sm:$0xf]
      %v657 = vld [vmem:[#allocation2 + $0xc] sm:$0xf]
      %v658 = vld [vmem:[#allocation2 + $0x10] sm:$0xf]
      %v659 = vld [vmem:[#allocation2 + $0x18] sm:$0xf]
      %v660 = vld [vmem:[#allocation2 + $0x1c] sm:$0xf]
      %v661 = vld [vmem:[#allocation2 + $0x24] sm:$0xf]
      %v662 = vld [vmem:[#allocation2 + $0x28] sm:$0xf]
      %v663 = vld [vmem:[%s3] sm:$0x3]
      %v664 = vld [vmem:[#allocation2 + $0x8] sm:$0x1]
      %v665 = vld [vmem:[#allocation2 + $0x14] sm:$0x1]
      %v666 = vld [vmem:[#allocation2 + $0x20] sm:$0x1]
      %v667 = vld [vmem:[#allocation2 + $0x2c] sm:$0x1]
      %vm668 = vsmask.f32 3328
      %vm669 = vsmask.f32 7440
      %vm670 = vmor %vm668, %vm669
      %v672 = vshrl.u32 %v655, 16
      %v674 = vrot.slane %v672, 4
      %v675 = vshll.u32 %v655, 16
      %v677 = vrot.slane %v675, 5
      %v678 = vor.u32 %v674, %v677
      %v679 = vrot.slane %v678, 4
      %v681 = vshll.u32 %v656, 16
      %v683 = vrot.slane %v681, 5
      %v684 = vsel %vm670, %v679, %v683
      %v685 = vshrl.u32 %v656, 16
      %v687 = vrot.slane %v685, 4
      %v688 = vor.u32 %v687, %v683
      %v689 = vrot.slane %v688, 4
      %v691 = vshll.u32 %v664, 16
      %v693 = vrot.slane %v691, 5
      %v694 = vsel %vm670, %v689, %v693
      %v696 = vshrl.u32 %v657, 16
      %v698 = vrot.slane %v696, 4
      %v699 = vshll.u32 %v657, 16
      %v701 = vrot.slane %v699, 5
      %v702 = vor.u32 %v698, %v701
      %v703 = vrot.slane %v702, 4
      %v705 = vshll.u32 %v658, 16
      %v707 = vrot.slane %v705, 5
      %v708 = vsel %vm670, %v703, %v707
      %v709 = vshrl.u32 %v658, 16
      %v711 = vrot.slane %v709, 4
      %v712 = vor.u32 %v711, %v707
      %v713 = vrot.slane %v712, 4
      %v715 = vshll.u32 %v665, 16
      %v717 = vrot.slane %v715, 5
      %v718 = vsel %vm670, %v713, %v717
      %v720 = vshrl.u32 %v659, 16
      %v722 = vrot.slane %v720, 4
      %v723 = vshll.u32 %v659, 16
      %v725 = vrot.slane %v723, 5
      %v726 = vor.u32 %v722, %v725
      %v727 = vrot.slane %v726, 4
      %v729 = vshll.u32 %v660, 16
      %v731 = vrot.slane %v729, 5
      %v732 = vsel %vm670, %v727, %v731
      %v733 = vshrl.u32 %v660, 16
      %v735 = vrot.slane %v733, 4
      %v736 = vor.u32 %v735, %v731
      %v737 = vrot.slane %v736, 4
      %v739 = vshll.u32 %v666, 16
      %v741 = vrot.slane %v739, 5
      %v742 = vsel %vm670, %v737, %v741
      %v744 = vshrl.u32 %v661, 16
      %v746 = vrot.slane %v744, 4
      %v747 = vshll.u32 %v661, 16
      %v749 = vrot.slane %v747, 5
      %v750 = vor.u32 %v746, %v749
      %v751 = vrot.slane %v750, 4
      %v753 = vshll.u32 %v662, 16
      %v755 = vrot.slane %v753, 5
      %v756 = vsel %vm670, %v751, %v755
      %v757 = vshrl.u32 %v662, 16
      %v759 = vrot.slane %v757, 4
      %v760 = vor.u32 %v759, %v755
      %v761 = vrot.slane %v760, 4
      %v763 = vshll.u32 %v667, 16
      %v765 = vrot.slane %v763, 5
      %v766 = vsel %vm670, %v761, %v765
      %s767 = scalar_lea.vmem %s3, 2
      %v768 = vld [vmem:[%s767] sm:$0x3]
      %v769 = vunpack.c.l.b16 %v684
      %v770 = vunpack.c.l.b16 %v694
      %v771 = vunpack.c.l.b16 %v708
      %v772 = vunpack.c.l.b16 %v718
      %v773 = vunpack.c.l.b16 %v732
      %v774 = vunpack.c.l.b16 %v742
      %v775 = vunpack.c.l.b16 %v756
      %v776 = vunpack.c.l.b16 %v766
      %v777 = vpack.c.b16 %v770, %v769
      %v778 = vpack.c.b16 %v772, %v771
      %v779 = vpack.c.b16 %v774, %v773
      %v780 = vpack.c.b16 %v776, %v775
      %vm781 = vcmask 31744
      %v783 = vsel %vm781, %v777, 0
      %v786 = vsel %vm781, %v778, 0
      %v789 = vsel %vm781, %v779, 0
      %v792 = vsel %vm781, %v780, 0
      %vm794 = vcmask 1041408
      %v796 = vsel %vm794, %v768, 0
      %798 = vmatprep.subr.bf16.mxu0 0
      %799 = vmatpush1.bf16.msra.mxu0 %v796
      %800 = vmatprep.subr.bf16.mxu0 0
      %801 = vmatpush1.bf16.msra.mxu0 0
      %802 = vmatprep.subr.bf16.mxu0 0
      %803 = vmatpush1.bf16.msra.mxu0 0
      %804 = vmatprep.subr.bf16.mxu0 0
      %805 = vmatpush1.bf16.msra.mxu0 0
      %806 = vmatprep.subr.bf16.mxu0 0
      %807 = vmatpush1.bf16.msra.mxu0 0
      %808 = vmatprep.subr.bf16.mxu0 0
      %809 = vmatpush1.bf16.msra.mxu0 0
      %810 = vmatprep.subr.bf16.mxu0 0
      %811 = vmatpush1.bf16.msra.mxu0 0
      %812 = vmatprep.subr.bf16.mxu0 0
      %813 = vmatpush1.bf16.msra.mxu0 0
      %814 = vmatprep.subr.bf16.mxu0 0
      %815 = vmatpush1.bf16.msra.mxu0 0
      %816 = vmatprep.subr.bf16.mxu0 0
      %817 = vmatpush1.bf16.msra.mxu0 0
      %818 = vmatprep.subr.bf16.mxu0 0
      %819 = vmatpush1.bf16.msra.mxu0 0
      %820 = vmatprep.subr.bf16.mxu0 0
      %821 = vmatpush1.bf16.msra.mxu0 0
      %822 = vmatprep.subr.bf16.mxu0 0
      %823 = vmatpush1.bf16.msra.mxu0 0
      %824 = vmatprep.subr.bf16.mxu0 0
      %825 = vmatpush1.bf16.msra.mxu0 0
      %826 = vmatprep.subr.bf16.mxu0 0
      %827 = vmatpush1.bf16.msra.mxu0 0
      %828 = vmatprep.subr.bf16.mxu0 0
      %829 = vmatpush1.bf16.msra.mxu0 0
      %830 = vmatprep.mubr.bf16.mxu0 0
      %831 = vmatmul.mubr.bf16.gmra.mrb[0].mxu0 %v783
      %v832 = vpop.f32.mrb[0].mxu0
      %v833 = vadd.f32 0.0, %v832
      %v834 = vpop.f32.mrb[0].mxu0
      %v835 = vpop.f32.mrb[0].mxu0
      %v836 = vadd.f32 0.0, %v835
      %v837 = vpop.f32.mrb[0].mxu0
      %838 = vmatprep.mubr.bf16.mxu0 0
      %839 = vmatmul.mubr.bf16.gmra.mrb[0].mxu0 %v786
      %v840 = vpop.f32.mrb[0].mxu0
      %v841 = vadd.f32 0.0, %v840
      %v842 = vpop.f32.mrb[0].mxu0
      %v843 = vpop.f32.mrb[0].mxu0
      %v844 = vadd.f32 0.0, %v843
      %v845 = vpop.f32.mrb[0].mxu0
      %846 = vmatprep.mubr.bf16.mxu0 0
      %847 = vmatmul.mubr.bf16.gmra.mrb[0].mxu0 %v789
      %v848 = vpop.f32.mrb[0].mxu0
      %v849 = vadd.f32 0.0, %v848
      %v850 = vpop.f32.mrb[0].mxu0
      %v851 = vpop.f32.mrb[0].mxu0
      %v852 = vadd.f32 0.0, %v851
      %v853 = vpop.f32.mrb[0].mxu0
      %854 = vmatprep.mubr.bf16.mxu0 0
      %855 = vmatmul.mubr.bf16.gmra.mrb[0].mxu0 %v792
      %v856 = vpop.f32.mrb[0].mxu0
      %v857 = vadd.f32 0.0, %v856
      %v858 = vpop.f32.mrb[0].mxu0
      %v859 = vpop.f32.mrb[0].mxu0
      %v860 = vadd.f32 0.0, %v859
      %v861 = vpop.f32.mrb[0].mxu0
      %862 = vdwg.mxu0
      %v871 = vunpack.c.l.b16 %v655
      %v872 = vunpack.c.l.b16 %v656
      %v873 = vunpack.c.l.b16 %v657
      %v874 = vunpack.c.l.b16 %v658
      %v875 = vunpack.c.l.b16 %v659
      %v876 = vunpack.c.l.b16 %v660
      %v877 = vunpack.c.l.b16 %v661
      %v878 = vunpack.c.l.b16 %v662
      %v879 = vpack.c.b16 %v872, %v871
      %v880 = vpack.c.b16 %v874, %v873
      %v881 = vpack.c.b16 %v876, %v875
      %v882 = vpack.c.b16 %v878, %v877
      %v884 = vsel %vm781, %v879, 0
      %v887 = vsel %vm781, %v880, 0
      %v890 = vsel %vm781, %v881, 0
      %v893 = vsel %vm781, %v882, 0
      %v896 = vsel %vm794, %v663, 0
      %898 = vmatprep.subr.bf16.mxu0 0
      %899 = vmatpush1.bf16.msra.mxu0 %v896
      %900 = vmatprep.subr.bf16.mxu0 0
      %901 = vmatpush1.bf16.msra.mxu0 0
      %902 = vmatprep.subr.bf16.mxu0 0
      %903 = vmatpush1.bf16.msra.mxu0 0
      %904 = vmatprep.subr.bf16.mxu0 0
      %905 = vmatpush1.bf16.msra.mxu0 0
      %906 = vmatprep.subr.bf16.mxu0 0
      %907 = vmatpush1.bf16.msra.mxu0 0
      %908 = vmatprep.subr.bf16.mxu0 0
      %909 = vmatpush1.bf16.msra.mxu0 0
      %910 = vmatprep.subr.bf16.mxu0 0
      %911 = vmatpush1.bf16.msra.mxu0 0
      %912 = vmatprep.subr.bf16.mxu0 0
      %913 = vmatpush1.bf16.msra.mxu0 0
      %914 = vmatprep.subr.bf16.mxu0 0
      %915 = vmatpush1.bf16.msra.mxu0 0
      %916 = vmatprep.subr.bf16.mxu0 0
      %917 = vmatpush1.bf16.msra.mxu0 0
      %918 = vmatprep.subr.bf16.mxu0 0
      %919 = vmatpush1.bf16.msra.mxu0 0
      %920 = vmatprep.subr.bf16.mxu0 0
      %921 = vmatpush1.bf16.msra.mxu0 0
      %922 = vmatprep.subr.bf16.mxu0 0
      %923 = vmatpush1.bf16.msra.mxu0 0
      %924 = vmatprep.subr.bf16.mxu0 0
      %925 = vmatpush1.bf16.msra.mxu0 0
      %926 = vmatprep.subr.bf16.mxu0 0
      %927 = vmatpush1.bf16.msra.mxu0 0
      %928 = vmatprep.subr.bf16.mxu0 0
      %929 = vmatpush1.bf16.msra.mxu0 0
      %930 = vmatprep.mubr.bf16.mxu0 0
      %931 = vmatmul.mubr.bf16.gmra.mrb[0].mxu0 %v884
      %v932 = vpop.f32.mrb[0].mxu0
      %v933 = vadd.f32 %v833, %v932
      %v934 = vpop.f32.mrb[0].mxu0
      %v935 = vpop.f32.mrb[0].mxu0
      %v936 = vadd.f32 %v836, %v935
      %v937 = vpop.f32.mrb[0].mxu0
      %938 = vmatprep.mubr.bf16.mxu0 0
      %939 = vmatmul.mubr.bf16.gmra.mrb[0].mxu0 %v887
      %v940 = vpop.f32.mrb[0].mxu0
      %v941 = vadd.f32 %v841, %v940
      %v942 = vpop.f32.mrb[0].mxu0
      %v943 = vpop.f32.mrb[0].mxu0
      %v944 = vadd.f32 %v844, %v943
      %v945 = vpop.f32.mrb[0].mxu0
      %946 = vmatprep.mubr.bf16.mxu0 0
      %947 = vmatmul.mubr.bf16.gmra.mrb[0].mxu0 %v890
      %v948 = vpop.f32.mrb[0].mxu0
      %v949 = vadd.f32 %v849, %v948
      %v950 = vpop.f32.mrb[0].mxu0
      %v951 = vpop.f32.mrb[0].mxu0
      %v952 = vadd.f32 %v852, %v951
      %v953 = vpop.f32.mrb[0].mxu0
      %954 = vmatprep.mubr.bf16.mxu0 0
      %955 = vmatmul.mubr.bf16.gmra.mrb[0].mxu0 %v893
      %v956 = vpop.f32.mrb[0].mxu0
      %v957 = vadd.f32 %v857, %v956
      %v958 = vpop.f32.mrb[0].mxu0
      %v959 = vpop.f32.mrb[0].mxu0
      %v960 = vadd.f32 %v860, %v959
      %v961 = vpop.f32.mrb[0].mxu0
      %962 = vdwg.mxu0
      %v963 = vld [vmem:[#allocation2] sm:$0xe]
      %v964 = vld [vmem:[#allocation2 + $0xc] sm:$0xe]
      %v965 = vld [vmem:[#allocation2 + $0x18] sm:$0xe]
      %v966 = vld [vmem:[#allocation2 + $0x24] sm:$0xe]
      %vm975 = vcmask 1042432
      %vm976 = vcmask 1046532
      %vm977 = vmor %vm975, %vm976
      %v978 = vrot.slane %v963, 5
      %v979 = vrot.slane %v978, 4
      %v980 = vrot.slane %v656, 5
      %v981 = vsel %vm977, %v979, %v980
      %v982 = vrot.slane %v980, 4
      %v983 = vrot.slane %v664, 5
      %v984 = vsel %vm977, %v982, %v983
      %v985 = vrot.slane %v964, 5
      %v986 = vrot.slane %v985, 4
      %v987 = vrot.slane %v658, 5
      %v988 = vsel %vm977, %v986, %v987
      %v989 = vrot.slane %v987, 4
      %v990 = vrot.slane %v665, 5
      %v991 = vsel %vm977, %v989, %v990
      %v992 = vrot.slane %v965, 5
      %v993 = vrot.slane %v992, 4
      %v994 = vrot.slane %v660, 5
      %v995 = vsel %vm977, %v993, %v994
      %v996 = vrot.slane %v994, 4
      %v997 = vrot.slane %v666, 5
      %v998 = vsel %vm977, %v996, %v997
      %v999 = vrot.slane %v966, 5
      %v1000 = vrot.slane %v999, 4
      %v1001 = vrot.slane %v662, 5
      %v1002 = vsel %vm977, %v1000, %v1001
      %v1003 = vrot.slane %v1001, 4
      %v1004 = vrot.slane %v667, 5
      %v1005 = vsel %vm977, %v1003, %v1004
      %s1006 = scalar_lea.vmem %s3, 4
      %v1007 = vld [vmem:[%s1006] sm:$0x3]
      %v1008 = vunpack.c.l.b16 %v981
      %v1009 = vunpack.c.l.b16 %v984
      %v1010 = vunpack.c.l.b16 %v988
      %v1011 = vunpack.c.l.b16 %v991
      %v1012 = vunpack.c.l.b16 %v995
      %v1013 = vunpack.c.l.b16 %v998
      %v1014 = vunpack.c.l.b16 %v1002
      %v1015 = vunpack.c.l.b16 %v1005
      %v1016 = vpack.c.b16 %v1009, %v1008
      %v1017 = vpack.c.b16 %v1011, %v1010
      %v1018 = vpack.c.b16 %v1013, %v1012
      %v1019 = vpack.c.b16 %v1015, %v1014
      %v1021 = vsel %vm781, %v1016, 0
      %v1024 = vsel %vm781, %v1017, 0
      %v1027 = vsel %vm781, %v1018, 0
      %v1030 = vsel %vm781, %v1019, 0
      %v1033 = vsel %vm794, %v1007, 0
      %1035 = vmatprep.subr.bf16.mxu0 0
      %1036 = vmatpush1.bf16.msra.mxu0 %v1033
      %1037 = vmatprep.subr.bf16.mxu0 0
      %1038 = vmatpush1.bf16.msra.mxu0 0
      %1039 = vmatprep.subr.bf16.mxu0 0
      %1040 = vmatpush1.bf16.msra.mxu0 0
      %1041 = vmatprep.subr.bf16.mxu0 0
      %1042 = vmatpush1.bf16.msra.mxu0 0
      %1043 = vmatprep.subr.bf16.mxu0 0
      %1044 = vmatpush1.bf16.msra.mxu0 0
      %1045 = vmatprep.subr.bf16.mxu0 0
      %1046 = vmatpush1.bf16.msra.mxu0 0
      %1047 = vmatprep.subr.bf16.mxu0 0
      %1048 = vmatpush1.bf16.msra.mxu0 0
      %1049 = vmatprep.subr.bf16.mxu0 0
      %1050 = vmatpush1.bf16.msra.mxu0 0
      %1051 = vmatprep.subr.bf16.mxu0 0
      %1052 = vmatpush1.bf16.msra.mxu0 0
      %1053 = vmatprep.subr.bf16.mxu0 0
      %1054 = vmatpush1.bf16.msra.mxu0 0
      %1055 = vmatprep.subr.bf16.mxu0 0
      %1056 = vmatpush1.bf16.msra.mxu0 0
      %1057 = vmatprep.subr.bf16.mxu0 0
      %1058 = vmatpush1.bf16.msra.mxu0 0
      %1059 = vmatprep.subr.bf16.mxu0 0
      %1060 = vmatpush1.bf16.msra.mxu0 0
      %1061 = vmatprep.subr.bf16.mxu0 0
      %1062 = vmatpush1.bf16.msra.mxu0 0
      %1063 = vmatprep.subr.bf16.mxu0 0
      %1064 = vmatpush1.bf16.msra.mxu0 0
      %1065 = vmatprep.subr.bf16.mxu0 0
      %1066 = vmatpush1.bf16.msra.mxu0 0
      %1067 = vmatprep.mubr.bf16.mxu0 0
      %1068 = vmatmul.mubr.bf16.gmra.mrb[0].mxu0 %v1021
      %v1069 = vpop.f32.mrb[0].mxu0
      %v1070 = vadd.f32 0.0, %v1069
      %v1071 = vpop.f32.mrb[0].mxu0
      %v1072 = vpop.f32.mrb[0].mxu0
      %v1073 = vadd.f32 0.0, %v1072
      %v1074 = vpop.f32.mrb[0].mxu0
      %1075 = vmatprep.mubr.bf16.mxu0 0
      %1076 = vmatmul.mubr.bf16.gmra.mrb[0].mxu0 %v1024
      %v1077 = vpop.f32.mrb[0].mxu0
      %v1078 = vadd.f32 0.0, %v1077
      %v1079 = vpop.f32.mrb[0].mxu0
      %v1080 = vpop.f32.mrb[0].mxu0
      %v1081 = vadd.f32 0.0, %v1080
      %v1082 = vpop.f32.mrb[0].mxu0
      %1083 = vmatprep.mubr.bf16.mxu0 0
      %1084 = vmatmul.mubr.bf16.gmra.mrb[0].mxu0 %v1027
      %v1085 = vpop.f32.mrb[0].mxu0
      %v1086 = vadd.f32 0.0, %v1085
      %v1087 = vpop.f32.mrb[0].mxu0
      %v1088 = vpop.f32.mrb[0].mxu0
      %v1089 = vadd.f32 0.0, %v1088
      %v1090 = vpop.f32.mrb[0].mxu0
      %1091 = vmatprep.mubr.bf16.mxu0 0
      %1092 = vmatmul.mubr.bf16.gmra.mrb[0].mxu0 %v1030
      %v1093 = vpop.f32.mrb[0].mxu0
      %v1094 = vadd.f32 0.0, %v1093
      %v1095 = vpop.f32.mrb[0].mxu0
      %v1096 = vpop.f32.mrb[0].mxu0
      %v1097 = vadd.f32 0.0, %v1096
      %v1098 = vpop.f32.mrb[0].mxu0
      %1099 = vdwg.mxu0
      %v1100 = vadd.f32 %v933, %v1070
      %v1101 = vadd.f32 %v936, %v1073
      %v1102 = vadd.f32 %v941, %v1078
      %v1103 = vadd.f32 %v944, %v1081
      %v1104 = vadd.f32 %v949, %v1086
      %v1105 = vadd.f32 %v952, %v1089
      %v1106 = vadd.f32 %v957, %v1094
      %v1107 = vadd.f32 %v960, %v1097
      %v1108 = vld [vmem:[%s512] sm:$0xf]
      %v1109 = vld [vmem:[%s512 + $0x4] sm:$0xf]
      %v1110 = vld [vmem:[%s512 + $0xc] sm:$0xf]
      %v1111 = vld [vmem:[%s512 + $0x10] sm:$0xf]
      %v1112 = vld [vmem:[%s512 + $0x18] sm:$0xf]
      %v1113 = vld [vmem:[%s512 + $0x1c] sm:$0xf]
      %v1114 = vld [vmem:[%s512 + $0x24] sm:$0xf]
      %v1115 = vld [vmem:[%s512 + $0x28] sm:$0xf]
      %s1116 = scalar_lea.vmem %s3, 6
      %v1117 = vld [vmem:[%s1116] sm:$0x3]
      %v1126 = vunpack.c.l.b16 %v1108
      %v1127 = vunpack.c.l.b16 %v1109
      %v1128 = vunpack.c.l.b16 %v1110
      %v1129 = vunpack.c.l.b16 %v1111
      %v1130 = vunpack.c.l.b16 %v1112
      %v1131 = vunpack.c.l.b16 %v1113
      %v1132 = vunpack.c.l.b16 %v1114
      %v1133 = vunpack.c.l.b16 %v1115
      %v1134 = vpack.c.b16 %v1127, %v1126
      %v1135 = vpack.c.b16 %v1129, %v1128
      %v1136 = vpack.c.b16 %v1131, %v1130
      %v1137 = vpack.c.b16 %v1133, %v1132
      %v1139 = vsel %vm781, %v1134, 0
      %v1142 = vsel %vm781, %v1135, 0
      %v1145 = vsel %vm781, %v1136, 0
      %v1148 = vsel %vm781, %v1137, 0
      %v1151 = vsel %vm794, %v1117, 0
      %1153 = vmatprep.subr.bf16.mxu0 0
      %1154 = vmatpush1.bf16.msra.mxu0 %v1151
      %1155 = vmatprep.subr.bf16.mxu0 0
      %1156 = vmatpush1.bf16.msra.mxu0 0
      %1157 = vmatprep.subr.bf16.mxu0 0
      %1158 = vmatpush1.bf16.msra.mxu0 0
      %1159 = vmatprep.subr.bf16.mxu0 0
      %1160 = vmatpush1.bf16.msra.mxu0 0
      %1161 = vmatprep.subr.bf16.mxu0 0
      %1162 = vmatpush1.bf16.msra.mxu0 0
      %1163 = vmatprep.subr.bf16.mxu0 0
      %1164 = vmatpush1.bf16.msra.mxu0 0
      %1165 = vmatprep.subr.bf16.mxu0 0
      %1166 = vmatpush1.bf16.msra.mxu0 0
      %1167 = vmatprep.subr.bf16.mxu0 0
      %1168 = vmatpush1.bf16.msra.mxu0 0
      %1169 = vmatprep.subr.bf16.mxu0 0
      %1170 = vmatpush1.bf16.msra.mxu0 0
      %1171 = vmatprep.subr.bf16.mxu0 0
      %1172 = vmatpush1.bf16.msra.mxu0 0
      %1173 = vmatprep.subr.bf16.mxu0 0
      %1174 = vmatpush1.bf16.msra.mxu0 0
      %1175 = vmatprep.subr.bf16.mxu0 0
      %1176 = vmatpush1.bf16.msra.mxu0 0
      %1177 = vmatprep.subr.bf16.mxu0 0
      %1178 = vmatpush1.bf16.msra.mxu0 0
      %1179 = vmatprep.subr.bf16.mxu0 0
      %1180 = vmatpush1.bf16.msra.mxu0 0
      %1181 = vmatprep.subr.bf16.mxu0 0
      %1182 = vmatpush1.bf16.msra.mxu0 0
      %1183 = vmatprep.subr.bf16.mxu0 0
      %1184 = vmatpush1.bf16.msra.mxu0 0
      %1185 = vmatprep.mubr.bf16.mxu0 0
      %1186 = vmatmul.mubr.bf16.gmra.mrb[0].mxu0 %v1139
      %v1187 = vpop.f32.mrb[0].mxu0
      %v1188 = vadd.f32 0.0, %v1187
      %v1189 = vpop.f32.mrb[0].mxu0
      %v1190 = vpop.f32.mrb[0].mxu0
      %v1191 = vadd.f32 0.0, %v1190
      %v1192 = vpop.f32.mrb[0].mxu0
      %1193 = vmatprep.mubr.bf16.mxu0 0
      %1194 = vmatmul.mubr.bf16.gmra.mrb[0].mxu0 %v1142
      %v1195 = vpop.f32.mrb[0].mxu0
      %v1196 = vadd.f32 0.0, %v1195
      %v1197 = vpop.f32.mrb[0].mxu0
      %v1198 = vpop.f32.mrb[0].mxu0
      %v1199 = vadd.f32 0.0, %v1198
      %v1200 = vpop.f32.mrb[0].mxu0
      %1201 = vmatprep.mubr.bf16.mxu0 0
      %1202 = vmatmul.mubr.bf16.gmra.mrb[0].mxu0 %v1145
      %v1203 = vpop.f32.mrb[0].mxu0
      %v1204 = vadd.f32 0.0, %v1203
      %v1205 = vpop.f32.mrb[0].mxu0
      %v1206 = vpop.f32.mrb[0].mxu0
      %v1207 = vadd.f32 0.0, %v1206
      %v1208 = vpop.f32.mrb[0].mxu0
      %1209 = vmatprep.mubr.bf16.mxu0 0
      %1210 = vmatmul.mubr.bf16.gmra.mrb[0].mxu0 %v1148
      %v1211 = vpop.f32.mrb[0].mxu0
      %v1212 = vadd.f32 0.0, %v1211
      %v1213 = vpop.f32.mrb[0].mxu0
      %v1214 = vpop.f32.mrb[0].mxu0
      %v1215 = vadd.f32 0.0, %v1214
      %v1216 = vpop.f32.mrb[0].mxu0
      %1217 = vdwg.mxu0
      %v1218 = vadd.f32 %v1100, %v1188
      %v1219 = vadd.f32 %v1101, %v1191
      %v1220 = vadd.f32 %v1102, %v1196
      %v1221 = vadd.f32 %v1103, %v1199
      %v1222 = vadd.f32 %v1104, %v1204
      %v1223 = vadd.f32 %v1105, %v1207
      %v1224 = vadd.f32 %v1106, %v1212
      %v1225 = vadd.f32 %v1107, %v1215
      %v1226 = vld [vmem:[%s512] sm:$0xf]
      %v1227 = vld [vmem:[%s512 + $0x4] sm:$0xf]
      %v1228 = vld [vmem:[%s512 + $0x8] sm:$0x1]
      %v1229 = vld [vmem:[%s512 + $0xc] sm:$0xf]
      %v1230 = vld [vmem:[%s512 + $0x10] sm:$0xf]
      %v1231 = vld [vmem:[%s512 + $0x14] sm:$0x1]
      %v1232 = vld [vmem:[%s512 + $0x18] sm:$0xf]
      %v1233 = vld [vmem:[%s512 + $0x1c] sm:$0xf]
      %v1234 = vld [vmem:[%s512 + $0x20] sm:$0x1]
      %v1235 = vld [vmem:[%s512 + $0x24] sm:$0xf]
      %v1236 = vld [vmem:[%s512 + $0x28] sm:$0xf]
      %v1237 = vld [vmem:[%s512 + $0x2c] sm:$0x1]
      %v1239 = vshrl.u32 %v1226, 16
      %v1241 = vrot.slane %v1239, 4
      %v1242 = vshll.u32 %v1226, 16
      %v1244 = vrot.slane %v1242, 5
      %v1245 = vor.u32 %v1241, %v1244
      %v1246 = vrot.slane %v1245, 4
      %v1248 = vshll.u32 %v1227, 16
      %v1250 = vrot.slane %v1248, 5
      %v1251 = vsel %vm670, %v1246, %v1250
      %v1252 = vshrl.u32 %v1227, 16
      %v1254 = vrot.slane %v1252, 4
      %v1255 = vor.u32 %v1254, %v1250
      %v1256 = vrot.slane %v1255, 4
      %v1258 = vshll.u32 %v1228, 16
      %v1260 = vrot.slane %v1258, 5
      %v1261 = vsel %vm670, %v1256, %v1260
      %v1263 = vshrl.u32 %v1229, 16
      %v1265 = vrot.slane %v1263, 4
      %v1266 = vshll.u32 %v1229, 16
      %v1268 = vrot.slane %v1266, 5
      %v1269 = vor.u32 %v1265, %v1268
      %v1270 = vrot.slane %v1269, 4
      %v1272 = vshll.u32 %v1230, 16
      %v1274 = vrot.slane %v1272, 5
      %v1275 = vsel %vm670, %v1270, %v1274
      %v1276 = vshrl.u32 %v1230, 16
      %v1278 = vrot.slane %v1276, 4
      %v1279 = vor.u32 %v1278, %v1274
      %v1280 = vrot.slane %v1279, 4
      %v1282 = vshll.u32 %v1231, 16
      %v1284 = vrot.slane %v1282, 5
      %v1285 = vsel %vm670, %v1280, %v1284
      %v1287 = vshrl.u32 %v1232, 16
      %v1289 = vrot.slane %v1287, 4
      %v1290 = vshll.u32 %v1232, 16
      %v1292 = vrot.slane %v1290, 5
      %v1293 = vor.u32 %v1289, %v1292
      %v1294 = vrot.slane %v1293, 4
      %v1296 = vshll.u32 %v1233, 16
      %v1298 = vrot.slane %v1296, 5
      %v1299 = vsel %vm670, %v1294, %v1298
      %v1300 = vshrl.u32 %v1233, 16
      %v1302 = vrot.slane %v1300, 4
      %v1303 = vor.u32 %v1302, %v1298
      %v1304 = vrot.slane %v1303, 4
      %v1306 = vshll.u32 %v1234, 16
      %v1308 = vrot.slane %v1306, 5
      %v1309 = vsel %vm670, %v1304, %v1308
      %v1311 = vshrl.u32 %v1235, 16
      %v1313 = vrot.slane %v1311, 4
      %v1314 = vshll.u32 %v1235, 16
      %v1316 = vrot.slane %v1314, 5
      %v1317 = vor.u32 %v1313, %v1316
      %v1318 = vrot.slane %v1317, 4
      %v1320 = vshll.u32 %v1236, 16
      %v1322 = vrot.slane %v1320, 5
      %v1323 = vsel %vm670, %v1318, %v1322
      %v1324 = vshrl.u32 %v1236, 16
      %v1326 = vrot.slane %v1324, 4
      %v1327 = vor.u32 %v1326, %v1322
      %v1328 = vrot.slane %v1327, 4
      %v1330 = vshll.u32 %v1237, 16
      %v1332 = vrot.slane %v1330, 5
      %v1333 = vsel %vm670, %v1328, %v1332
      %s1334 = scalar_lea.vmem %s3, 8
      %v1335 = vld [vmem:[%s1334] sm:$0x3]
      %v1336 = vunpack.c.l.b16 %v1251
      %v1337 = vunpack.c.l.b16 %v1261
      %v1338 = vunpack.c.l.b16 %v1275
      %v1339 = vunpack.c.l.b16 %v1285
      %v1340 = vunpack.c.l.b16 %v1299
      %v1341 = vunpack.c.l.b16 %v1309
      %v1342 = vunpack.c.l.b16 %v1323
      %v1343 = vunpack.c.l.b16 %v1333
      %v1344 = vpack.c.b16 %v1337, %v1336
      %v1345 = vpack.c.b16 %v1339, %v1338
      %v1346 = vpack.c.b16 %v1341, %v1340
      %v1347 = vpack.c.b16 %v1343, %v1342
      %v1349 = vsel %vm781, %v1344, 0
      %v1352 = vsel %vm781, %v1345, 0
      %v1355 = vsel %vm781, %v1346, 0
      %v1358 = vsel %vm781, %v1347, 0
      %v1361 = vsel %vm794, %v1335, 0
      %1363 = vmatprep.subr.bf16.mxu0 0
      %1364 = vmatpush1.bf16.msra.mxu0 %v1361
      %1365 = vmatprep.subr.bf16.mxu0 0
      %1366 = vmatpush1.bf16.msra.mxu0 0
      %1367 = vmatprep.subr.bf16.mxu0 0
      %1368 = vmatpush1.bf16.msra.mxu0 0
      %1369 = vmatprep.subr.bf16.mxu0 0
      %1370 = vmatpush1.bf16.msra.mxu0 0
      %1371 = vmatprep.subr.bf16.mxu0 0
      %1372 = vmatpush1.bf16.msra.mxu0 0
      %1373 = vmatprep.subr.bf16.mxu0 0
      %1374 = vmatpush1.bf16.msra.mxu0 0
      %1375 = vmatprep.subr.bf16.mxu0 0
      %1376 = vmatpush1.bf16.msra.mxu0 0
      %1377 = vmatprep.subr.bf16.mxu0 0
      %1378 = vmatpush1.bf16.msra.mxu0 0
      %1379 = vmatprep.subr.bf16.mxu0 0
      %1380 = vmatpush1.bf16.msra.mxu0 0
      %1381 = vmatprep.subr.bf16.mxu0 0
      %1382 = vmatpush1.bf16.msra.mxu0 0
      %1383 = vmatprep.subr.bf16.mxu0 0
      %1384 = vmatpush1.bf16.msra.mxu0 0
      %1385 = vmatprep.subr.bf16.mxu0 0
      %1386 = vmatpush1.bf16.msra.mxu0 0
      %1387 = vmatprep.subr.bf16.mxu0 0
      %1388 = vmatpush1.bf16.msra.mxu0 0
      %1389 = vmatprep.subr.bf16.mxu0 0
      %1390 = vmatpush1.bf16.msra.mxu0 0
      %1391 = vmatprep.subr.bf16.mxu0 0
      %1392 = vmatpush1.bf16.msra.mxu0 0
      %1393 = vmatprep.subr.bf16.mxu0 0
      %1394 = vmatpush1.bf16.msra.mxu0 0
      %1395 = vmatprep.mubr.bf16.mxu0 0
      %1396 = vmatmul.mubr.bf16.gmra.mrb[0].mxu0 %v1349
      %v1397 = vpop.f32.mrb[0].mxu0
      %v1398 = vadd.f32 0.0, %v1397
      %v1399 = vpop.f32.mrb[0].mxu0
      %v1400 = vpop.f32.mrb[0].mxu0
      %v1401 = vadd.f32 0.0, %v1400
      %v1402 = vpop.f32.mrb[0].mxu0
      %1403 = vmatprep.mubr.bf16.mxu0 0
      %1404 = vmatmul.mubr.bf16.gmra.mrb[0].mxu0 %v1352
      %v1405 = vpop.f32.mrb[0].mxu0
      %v1406 = vadd.f32 0.0, %v1405
      %v1407 = vpop.f32.mrb[0].mxu0
      %v1408 = vpop.f32.mrb[0].mxu0
      %v1409 = vadd.f32 0.0, %v1408
      %v1410 = vpop.f32.mrb[0].mxu0
      %1411 = vmatprep.mubr.bf16.mxu0 0
      %1412 = vmatmul.mubr.bf16.gmra.mrb[0].mxu0 %v1355
      %v1413 = vpop.f32.mrb[0].mxu0
      %v1414 = vadd.f32 0.0, %v1413
      %v1415 = vpop.f32.mrb[0].mxu0
      %v1416 = vpop.f32.mrb[0].mxu0
      %v1417 = vadd.f32 0.0, %v1416
      %v1418 = vpop.f32.mrb[0].mxu0
      %1419 = vmatprep.mubr.bf16.mxu0 0
      %1420 = vmatmul.mubr.bf16.gmra.mrb[0].mxu0 %v1358
      %v1421 = vpop.f32.mrb[0].mxu0
      %v1422 = vadd.f32 0.0, %v1421
      %v1423 = vpop.f32.mrb[0].mxu0
      %v1424 = vpop.f32.mrb[0].mxu0
      %v1425 = vadd.f32 0.0, %v1424
      %v1426 = vpop.f32.mrb[0].mxu0
      %1427 = vdwg.mxu0
      %v1428 = vadd.f32 %v1218, %v1398
      %v1429 = vadd.f32 %v1219, %v1401
      %v1430 = vadd.f32 %v1220, %v1406
      %v1431 = vadd.f32 %v1221, %v1409
      %v1432 = vadd.f32 %v1222, %v1414
      %v1433 = vadd.f32 %v1223, %v1417
      %v1434 = vadd.f32 %v1224, %v1422
      %v1435 = vadd.f32 %v1225, %v1425
      %v1436 = vld [vmem:[%s512] sm:$0xe]
      %v1437 = vld [vmem:[%s512 + $0xc] sm:$0xe]
      %v1438 = vld [vmem:[%s512 + $0x18] sm:$0xe]
      %v1439 = vld [vmem:[%s512 + $0x24] sm:$0xe]
      %v1452 = vrot.slane %v1436, 5
      %v1453 = vrot.slane %v1452, 4
      %v1454 = vrot.slane %v1227, 5
      %v1455 = vsel %vm977, %v1453, %v1454
      %v1456 = vrot.slane %v1454, 4
      %v1457 = vrot.slane %v1228, 5
      %v1458 = vsel %vm977, %v1456, %v1457
      %v1459 = vrot.slane %v1437, 5
      %v1460 = vrot.slane %v1459, 4
      %v1461 = vrot.slane %v1230, 5
      %v1462 = vsel %vm977, %v1460, %v1461
      %v1463 = vrot.slane %v1461, 4
      %v1464 = vrot.slane %v1231, 5
      %v1465 = vsel %vm977, %v1463, %v1464
      %v1466 = vrot.slane %v1438, 5
      %v1467 = vrot.slane %v1466, 4
      %v1468 = vrot.slane %v1233, 5
      %v1469 = vsel %vm977, %v1467, %v1468
      %v1470 = vrot.slane %v1468, 4
      %v1471 = vrot.slane %v1234, 5
      %v1472 = vsel %vm977, %v1470, %v1471
      %v1473 = vrot.slane %v1439, 5
      %v1474 = vrot.slane %v1473, 4
      %v1475 = vrot.slane %v1236, 5
      %v1476 = vsel %vm977, %v1474, %v1475
      %v1477 = vrot.slane %v1475, 4
      %v1478 = vrot.slane %v1237, 5
      %v1479 = vsel %vm977, %v1477, %v1478
      %s1480 = scalar_lea.vmem %s3, 10
      %v1481 = vld [vmem:[%s1480] sm:$0x3]
      %v1482 = vunpack.c.l.b16 %v1455
      %v1483 = vunpack.c.l.b16 %v1458
      %v1484 = vunpack.c.l.b16 %v1462
      %v1485 = vunpack.c.l.b16 %v1465
      %v1486 = vunpack.c.l.b16 %v1469
      %v1487 = vunpack.c.l.b16 %v1472
      %v1488 = vunpack.c.l.b16 %v1476
      %v1489 = vunpack.c.l.b16 %v1479
      %v1490 = vpack.c.b16 %v1483, %v1482
      %v1491 = vpack.c.b16 %v1485, %v1484
      %v1492 = vpack.c.b16 %v1487, %v1486
      %v1493 = vpack.c.b16 %v1489, %v1488
      %v1495 = vsel %vm781, %v1490, 0
      %v1498 = vsel %vm781, %v1491, 0
      %v1501 = vsel %vm781, %v1492, 0
      %v1504 = vsel %vm781, %v1493, 0
      %v1507 = vsel %vm794, %v1481, 0
      %1509 = vmatprep.subr.bf16.mxu0 0
      %1510 = vmatpush1.bf16.msra.mxu0 %v1507
      %1511 = vmatprep.subr.bf16.mxu0 0
      %1512 = vmatpush1.bf16.msra.mxu0 0
      %1513 = vmatprep.subr.bf16.mxu0 0
      %1514 = vmatpush1.bf16.msra.mxu0 0
      %1515 = vmatprep.subr.bf16.mxu0 0
      %1516 = vmatpush1.bf16.msra.mxu0 0
      %1517 = vmatprep.subr.bf16.mxu0 0
      %1518 = vmatpush1.bf16.msra.mxu0 0
      %1519 = vmatprep.subr.bf16.mxu0 0
      %1520 = vmatpush1.bf16.msra.mxu0 0
      %1521 = vmatprep.subr.bf16.mxu0 0
      %1522 = vmatpush1.bf16.msra.mxu0 0
      %1523 = vmatprep.subr.bf16.mxu0 0
      %1524 = vmatpush1.bf16.msra.mxu0 0
      %1525 = vmatprep.subr.bf16.mxu0 0
      %1526 = vmatpush1.bf16.msra.mxu0 0
      %1527 = vmatprep.subr.bf16.mxu0 0
      %1528 = vmatpush1.bf16.msra.mxu0 0
      %1529 = vmatprep.subr.bf16.mxu0 0
      %1530 = vmatpush1.bf16.msra.mxu0 0
      %1531 = vmatprep.subr.bf16.mxu0 0
      %1532 = vmatpush1.bf16.msra.mxu0 0
      %1533 = vmatprep.subr.bf16.mxu0 0
      %1534 = vmatpush1.bf16.msra.mxu0 0
      %1535 = vmatprep.subr.bf16.mxu0 0
      %1536 = vmatpush1.bf16.msra.mxu0 0
      %1537 = vmatprep.subr.bf16.mxu0 0
      %1538 = vmatpush1.bf16.msra.mxu0 0
      %1539 = vmatprep.subr.bf16.mxu0 0
      %1540 = vmatpush1.bf16.msra.mxu0 0
      %1541 = vmatprep.mubr.bf16.mxu0 0
      %1542 = vmatmul.mubr.bf16.gmra.mrb[0].mxu0 %v1495
      %v1543 = vpop.f32.mrb[0].mxu0
      %v1544 = vadd.f32 0.0, %v1543
      %v1545 = vpop.f32.mrb[0].mxu0
      %v1546 = vpop.f32.mrb[0].mxu0
      %v1547 = vadd.f32 0.0, %v1546
      %v1548 = vpop.f32.mrb[0].mxu0
      %1549 = vmatprep.mubr.bf16.mxu0 0
      %1550 = vmatmul.mubr.bf16.gmra.mrb[0].mxu0 %v1498
      %v1551 = vpop.f32.mrb[0].mxu0
      %v1552 = vadd.f32 0.0, %v1551
      %v1553 = vpop.f32.mrb[0].mxu0
      %v1554 = vpop.f32.mrb[0].mxu0
      %v1555 = vadd.f32 0.0, %v1554
      %v1556 = vpop.f32.mrb[0].mxu0
      %1557 = vmatprep.mubr.bf16.mxu0 0
      %1558 = vmatmul.mubr.bf16.gmra.mrb[0].mxu0 %v1501
      %v1559 = vpop.f32.mrb[0].mxu0
      %v1560 = vadd.f32 0.0, %v1559
      %v1561 = vpop.f32.mrb[0].mxu0
      %v1562 = vpop.f32.mrb[0].mxu0
      %v1563 = vadd.f32 0.0, %v1562
      %v1564 = vpop.f32.mrb[0].mxu0
      %1565 = vmatprep.mubr.bf16.mxu0 0
      %1566 = vmatmul.mubr.bf16.gmra.mrb[0].mxu0 %v1504
      %v1567 = vpop.f32.mrb[0].mxu0
      %v1568 = vadd.f32 0.0, %v1567
      %v1569 = vpop.f32.mrb[0].mxu0
      %v1570 = vpop.f32.mrb[0].mxu0
      %v1571 = vadd.f32 0.0, %v1570
      %v1572 = vpop.f32.mrb[0].mxu0
      %1573 = vdwg.mxu0
      %v1574 = vadd.f32 %v1428, %v1544
      %v1575 = vadd.f32 %v1429, %v1547
      %v1576 = vadd.f32 %v1430, %v1552
      %v1577 = vadd.f32 %v1431, %v1555
      %v1578 = vadd.f32 %v1432, %v1560
      %v1579 = vadd.f32 %v1433, %v1563
      %v1580 = vadd.f32 %v1434, %v1568
      %v1581 = vadd.f32 %v1435, %v1571
      %s1582 = scalar_lea.vmem [#allocation2], 24
      %v1583 = vld [vmem:[%s1582] sm:$0xf]
      %v1584 = vld [vmem:[%s1582 + $0x4] sm:$0xf]
      %v1585 = vld [vmem:[%s1582 + $0xc] sm:$0xf]
      %v1586 = vld [vmem:[%s1582 + $0x10] sm:$0xf]
      %v1587 = vld [vmem:[%s1582 + $0x18] sm:$0xf]
      %v1588 = vld [vmem:[%s1582 + $0x1c] sm:$0xf]
      %v1589 = vld [vmem:[%s1582 + $0x24] sm:$0xf]
      %v1590 = vld [vmem:[%s1582 + $0x28] sm:$0xf]
      %s1591 = scalar_lea.vmem %s3, 12
      %v1592 = vld [vmem:[%s1591] sm:$0x3]
      %v1601 = vunpack.c.l.b16 %v1583
      %v1602 = vunpack.c.l.b16 %v1584
      %v1603 = vunpack.c.l.b16 %v1585
      %v1604 = vunpack.c.l.b16 %v1586
      %v1605 = vunpack.c.l.b16 %v1587
      %v1606 = vunpack.c.l.b16 %v1588
      %v1607 = vunpack.c.l.b16 %v1589
      %v1608 = vunpack.c.l.b16 %v1590
      %v1609 = vpack.c.b16 %v1602, %v1601
      %v1610 = vpack.c.b16 %v1604, %v1603
      %v1611 = vpack.c.b16 %v1606, %v1605
      %v1612 = vpack.c.b16 %v1608, %v1607
      %v1614 = vsel %vm781, %v1609, 0
      %v1617 = vsel %vm781, %v1610, 0
      %v1620 = vsel %vm781, %v1611, 0
      %v1623 = vsel %vm781, %v1612, 0
      %v1626 = vsel %vm794, %v1592, 0
      %1628 = vmatprep.subr.bf16.mxu0 0
      %1629 = vmatpush1.bf16.msra.mxu0 %v1626
      %1630 = vmatprep.subr.bf16.mxu0 0
      %1631 = vmatpush1.bf16.msra.mxu0 0
      %1632 = vmatprep.subr.bf16.mxu0 0
      %1633 = vmatpush1.bf16.msra.mxu0 0
      %1634 = vmatprep.subr.bf16.mxu0 0
      %1635 = vmatpush1.bf16.msra.mxu0 0
      %1636 = vmatprep.subr.bf16.mxu0 0
      %1637 = vmatpush1.bf16.msra.mxu0 0
      %1638 = vmatprep.subr.bf16.mxu0 0
      %1639 = vmatpush1.bf16.msra.mxu0 0
      %1640 = vmatprep.subr.bf16.mxu0 0
      %1641 = vmatpush1.bf16.msra.mxu0 0
      %1642 = vmatprep.subr.bf16.mxu0 0
      %1643 = vmatpush1.bf16.msra.mxu0 0
      %1644 = vmatprep.subr.bf16.mxu0 0
      %1645 = vmatpush1.bf16.msra.mxu0 0
      %1646 = vmatprep.subr.bf16.mxu0 0
      %1647 = vmatpush1.bf16.msra.mxu0 0
      %1648 = vmatprep.subr.bf16.mxu0 0
      %1649 = vmatpush1.bf16.msra.mxu0 0
      %1650 = vmatprep.subr.bf16.mxu0 0
      %1651 = vmatpush1.bf16.msra.mxu0 0
      %1652 = vmatprep.subr.bf16.mxu0 0
      %1653 = vmatpush1.bf16.msra.mxu0 0
      %1654 = vmatprep.subr.bf16.mxu0 0
      %1655 = vmatpush1.bf16.msra.mxu0 0
      %1656 = vmatprep.subr.bf16.mxu0 0
      %1657 = vmatpush1.bf16.msra.mxu0 0
      %1658 = vmatprep.subr.bf16.mxu0 0
      %1659 = vmatpush1.bf16.msra.mxu0 0
      %1660 = vmatprep.mubr.bf16.mxu0 0
      %1661 = vmatmul.mubr.bf16.gmra.mrb[0].mxu0 %v1614
      %v1662 = vpop.f32.mrb[0].mxu0
      %v1663 = vadd.f32 0.0, %v1662
      %v1664 = vpop.f32.mrb[0].mxu0
      %v1665 = vpop.f32.mrb[0].mxu0
      %v1666 = vadd.f32 0.0, %v1665
      %v1667 = vpop.f32.mrb[0].mxu0
      %1668 = vmatprep.mubr.bf16.mxu0 0
      %1669 = vmatmul.mubr.bf16.gmra.mrb[0].mxu0 %v1617
      %v1670 = vpop.f32.mrb[0].mxu0
      %v1671 = vadd.f32 0.0, %v1670
      %v1672 = vpop.f32.mrb[0].mxu0
      %v1673 = vpop.f32.mrb[0].mxu0
      %v1674 = vadd.f32 0.0, %v1673
      %v1675 = vpop.f32.mrb[0].mxu0
      %1676 = vmatprep.mubr.bf16.mxu0 0
      %1677 = vmatmul.mubr.bf16.gmra.mrb[0].mxu0 %v1620
      %v1678 = vpop.f32.mrb[0].mxu0
      %v1679 = vadd.f32 0.0, %v1678
      %v1680 = vpop.f32.mrb[0].mxu0
      %v1681 = vpop.f32.mrb[0].mxu0
      %v1682 = vadd.f32 0.0, %v1681
      %v1683 = vpop.f32.mrb[0].mxu0
      %1684 = vmatprep.mubr.bf16.mxu0 0
      %1685 = vmatmul.mubr.bf16.gmra.mrb[0].mxu0 %v1623
      %v1686 = vpop.f32.mrb[0].mxu0
      %v1687 = vadd.f32 0.0, %v1686
      %v1688 = vpop.f32.mrb[0].mxu0
      %v1689 = vpop.f32.mrb[0].mxu0
      %v1690 = vadd.f32 0.0, %v1689
      %v1691 = vpop.f32.mrb[0].mxu0
      %1692 = vdwg.mxu0
      %v1693 = vadd.f32 %v1574, %v1663
      %v1694 = vadd.f32 %v1575, %v1666
      %v1695 = vadd.f32 %v1576, %v1671
      %v1696 = vadd.f32 %v1577, %v1674
      %v1697 = vadd.f32 %v1578, %v1679
      %v1698 = vadd.f32 %v1579, %v1682
      %v1699 = vadd.f32 %v1580, %v1687
      %v1700 = vadd.f32 %v1581, %v1690
      %v1701 = vld [vmem:[%s1582] sm:$0xf]
      %v1702 = vld [vmem:[%s1582 + $0x4] sm:$0xf]
      %v1703 = vld [vmem:[%s1582 + $0x8] sm:$0x1]
      %v1704 = vld [vmem:[%s1582 + $0xc] sm:$0xf]
      %v1705 = vld [vmem:[%s1582 + $0x10] sm:$0xf]
      %v1706 = vld [vmem:[%s1582 + $0x14] sm:$0x1]
      %v1707 = vld [vmem:[%s1582 + $0x18] sm:$0xf]
      %v1708 = vld [vmem:[%s1582 + $0x1c] sm:$0xf]
      %v1709 = vld [vmem:[%s1582 + $0x20] sm:$0x1]
      %v1710 = vld [vmem:[%s1582 + $0x24] sm:$0xf]
      %v1711 = vld [vmem:[%s1582 + $0x28] sm:$0xf]
      %v1712 = vld [vmem:[%s1582 + $0x2c] sm:$0x1]
      %v1714 = vshrl.u32 %v1701, 16
      %v1716 = vrot.slane %v1714, 4
      %v1717 = vshll.u32 %v1701, 16
      %v1719 = vrot.slane %v1717, 5
      %v1720 = vor.u32 %v1716, %v1719
      %v1721 = vrot.slane %v1720, 4
      %v1723 = vshll.u32 %v1702, 16
      %v1725 = vrot.slane %v1723, 5
      %v1726 = vsel %vm670, %v1721, %v1725
      %v1727 = vshrl.u32 %v1702, 16
      %v1729 = vrot.slane %v1727, 4
      %v1730 = vor.u32 %v1729, %v1725
      %v1731 = vrot.slane %v1730, 4
      %v1733 = vshll.u32 %v1703, 16
      %v1735 = vrot.slane %v1733, 5
      %v1736 = vsel %vm670, %v1731, %v1735
      %v1738 = vshrl.u32 %v1704, 16
      %v1740 = vrot.slane %v1738, 4
      %v1741 = vshll.u32 %v1704, 16
      %v1743 = vrot.slane %v1741, 5
      %v1744 = vor.u32 %v1740, %v1743
      %v1745 = vrot.slane %v1744, 4
      %v1747 = vshll.u32 %v1705, 16
      %v1749 = vrot.slane %v1747, 5
      %v1750 = vsel %vm670, %v1745, %v1749
      %v1751 = vshrl.u32 %v1705, 16
      %v1753 = vrot.slane %v1751, 4
      %v1754 = vor.u32 %v1753, %v1749
      %v1755 = vrot.slane %v1754, 4
      %v1757 = vshll.u32 %v1706, 16
      %v1759 = vrot.slane %v1757, 5
      %v1760 = vsel %vm670, %v1755, %v1759
      %v1762 = vshrl.u32 %v1707, 16
      %v1764 = vrot.slane %v1762, 4
      %v1765 = vshll.u32 %v1707, 16
      %v1767 = vrot.slane %v1765, 5
      %v1768 = vor.u32 %v1764, %v1767
      %v1769 = vrot.slane %v1768, 4
      %v1771 = vshll.u32 %v1708, 16
      %v1773 = vrot.slane %v1771, 5
      %v1774 = vsel %vm670, %v1769, %v1773
      %v1775 = vshrl.u32 %v1708, 16
      %v1777 = vrot.slane %v1775, 4
      %v1778 = vor.u32 %v1777, %v1773
      %v1779 = vrot.slane %v1778, 4
      %v1781 = vshll.u32 %v1709, 16
      %v1783 = vrot.slane %v1781, 5
      %v1784 = vsel %vm670, %v1779, %v1783
      %v1786 = vshrl.u32 %v1710, 16
      %v1788 = vrot.slane %v1786, 4
      %v1789 = vshll.u32 %v1710, 16
      %v1791 = vrot.slane %v1789, 5
      %v1792 = vor.u32 %v1788, %v1791
      %v1793 = vrot.slane %v1792, 4
      %v1795 = vshll.u32 %v1711, 16
      %v1797 = vrot.slane %v1795, 5
      %v1798 = vsel %vm670, %v1793, %v1797
      %v1799 = vshrl.u32 %v1711, 16
      %v1801 = vrot.slane %v1799, 4
      %v1802 = vor.u32 %v1801, %v1797
      %v1803 = vrot.slane %v1802, 4
      %v1805 = vshll.u32 %v1712, 16
      %v1807 = vrot.slane %v1805, 5
      %v1808 = vsel %vm670, %v1803, %v1807
      %s1809 = scalar_lea.vmem %s3, 14
      %v1810 = vld [vmem:[%s1809] sm:$0x3]
      %v1811 = vunpack.c.l.b16 %v1726
      %v1812 = vunpack.c.l.b16 %v1736
      %v1813 = vunpack.c.l.b16 %v1750
      %v1814 = vunpack.c.l.b16 %v1760
      %v1815 = vunpack.c.l.b16 %v1774
      %v1816 = vunpack.c.l.b16 %v1784
      %v1817 = vunpack.c.l.b16 %v1798
      %v1818 = vunpack.c.l.b16 %v1808
      %v1819 = vpack.c.b16 %v1812, %v1811
      %v1820 = vpack.c.b16 %v1814, %v1813
      %v1821 = vpack.c.b16 %v1816, %v1815
      %v1822 = vpack.c.b16 %v1818, %v1817
      %v1824 = vsel %vm781, %v1819, 0
      %v1827 = vsel %vm781, %v1820, 0
      %v1830 = vsel %vm781, %v1821, 0
      %v1833 = vsel %vm781, %v1822, 0
      %v1836 = vsel %vm794, %v1810, 0
      %1838 = vmatprep.subr.bf16.mxu0 0
      %1839 = vmatpush1.bf16.msra.mxu0 %v1836
      %1840 = vmatprep.subr.bf16.mxu0 0
      %1841 = vmatpush1.bf16.msra.mxu0 0
      %1842 = vmatprep.subr.bf16.mxu0 0
      %1843 = vmatpush1.bf16.msra.mxu0 0
      %1844 = vmatprep.subr.bf16.mxu0 0
      %1845 = vmatpush1.bf16.msra.mxu0 0
      %1846 = vmatprep.subr.bf16.mxu0 0
      %1847 = vmatpush1.bf16.msra.mxu0 0
      %1848 = vmatprep.subr.bf16.mxu0 0
      %1849 = vmatpush1.bf16.msra.mxu0 0
      %1850 = vmatprep.subr.bf16.mxu0 0
      %1851 = vmatpush1.bf16.msra.mxu0 0
      %1852 = vmatprep.subr.bf16.mxu0 0
      %1853 = vmatpush1.bf16.msra.mxu0 0
      %1854 = vmatprep.subr.bf16.mxu0 0
      %1855 = vmatpush1.bf16.msra.mxu0 0
      %1856 = vmatprep.subr.bf16.mxu0 0
      %1857 = vmatpush1.bf16.msra.mxu0 0
      %1858 = vmatprep.subr.bf16.mxu0 0
      %1859 = vmatpush1.bf16.msra.mxu0 0
      %1860 = vmatprep.subr.bf16.mxu0 0
      %1861 = vmatpush1.bf16.msra.mxu0 0
      %1862 = vmatprep.subr.bf16.mxu0 0
      %1863 = vmatpush1.bf16.msra.mxu0 0
      %1864 = vmatprep.subr.bf16.mxu0 0
      %1865 = vmatpush1.bf16.msra.mxu0 0
      %1866 = vmatprep.subr.bf16.mxu0 0
      %1867 = vmatpush1.bf16.msra.mxu0 0
      %1868 = vmatprep.subr.bf16.mxu0 0
      %1869 = vmatpush1.bf16.msra.mxu0 0
      %1870 = vmatprep.mubr.bf16.mxu0 0
      %1871 = vmatmul.mubr.bf16.gmra.mrb[0].mxu0 %v1824
      %v1872 = vpop.f32.mrb[0].mxu0
      %v1873 = vadd.f32 0.0, %v1872
      %v1874 = vpop.f32.mrb[0].mxu0
      %v1875 = vpop.f32.mrb[0].mxu0
      %v1876 = vadd.f32 0.0, %v1875
      %v1877 = vpop.f32.mrb[0].mxu0
      %1878 = vmatprep.mubr.bf16.mxu0 0
      %1879 = vmatmul.mubr.bf16.gmra.mrb[0].mxu0 %v1827
      %v1880 = vpop.f32.mrb[0].mxu0
      %v1881 = vadd.f32 0.0, %v1880
      %v1882 = vpop.f32.mrb[0].mxu0
      %v1883 = vpop.f32.mrb[0].mxu0
      %v1884 = vadd.f32 0.0, %v1883
      %v1885 = vpop.f32.mrb[0].mxu0
      %1886 = vmatprep.mubr.bf16.mxu0 0
      %1887 = vmatmul.mubr.bf16.gmra.mrb[0].mxu0 %v1830
      %v1888 = vpop.f32.mrb[0].mxu0
      %v1889 = vadd.f32 0.0, %v1888
      %v1890 = vpop.f32.mrb[0].mxu0
      %v1891 = vpop.f32.mrb[0].mxu0
      %v1892 = vadd.f32 0.0, %v1891
      %v1893 = vpop.f32.mrb[0].mxu0
      %1894 = vmatprep.mubr.bf16.mxu0 0
      %1895 = vmatmul.mubr.bf16.gmra.mrb[0].mxu0 %v1833
      %v1896 = vpop.f32.mrb[0].mxu0
      %v1897 = vadd.f32 0.0, %v1896
      %v1898 = vpop.f32.mrb[0].mxu0
      %v1899 = vpop.f32.mrb[0].mxu0
      %v1900 = vadd.f32 0.0, %v1899
      %v1901 = vpop.f32.mrb[0].mxu0
      %1902 = vdwg.mxu0
      %v1903 = vadd.f32 %v1693, %v1873
      %v1904 = vadd.f32 %v1694, %v1876
      %v1905 = vadd.f32 %v1695, %v1881
      %v1906 = vadd.f32 %v1696, %v1884
      %v1907 = vadd.f32 %v1697, %v1889
      %v1908 = vadd.f32 %v1698, %v1892
      %v1909 = vadd.f32 %v1699, %v1897
      %v1910 = vadd.f32 %v1700, %v1900
      %v1911 = vld [vmem:[%s1582] sm:$0xe]
      %v1912 = vld [vmem:[%s1582 + $0xc] sm:$0xe]
      %v1913 = vld [vmem:[%s1582 + $0x18] sm:$0xe]
      %v1914 = vld [vmem:[%s1582 + $0x24] sm:$0xe]
      %v1927 = vrot.slane %v1911, 5
      %v1928 = vrot.slane %v1927, 4
      %v1929 = vrot.slane %v1702, 5
      %v1930 = vsel %vm977, %v1928, %v1929
      %v1931 = vrot.slane %v1929, 4
      %v1932 = vrot.slane %v1703, 5
      %v1933 = vsel %vm977, %v1931, %v1932
      %v1934 = vrot.slane %v1912, 5
      %v1935 = vrot.slane %v1934, 4
      %v1936 = vrot.slane %v1705, 5
      %v1937 = vsel %vm977, %v1935, %v1936
      %v1938 = vrot.slane %v1936, 4
      %v1939 = vrot.slane %v1706, 5
      %v1940 = vsel %vm977, %v1938, %v1939
      %v1941 = vrot.slane %v1913, 5
      %v1942 = vrot.slane %v1941, 4
      %v1943 = vrot.slane %v1708, 5
      %v1944 = vsel %vm977, %v1942, %v1943
      %v1945 = vrot.slane %v1943, 4
      %v1946 = vrot.slane %v1709, 5
      %v1947 = vsel %vm977, %v1945, %v1946
      %v1948 = vrot.slane %v1914, 5
      %v1949 = vrot.slane %v1948, 4
      %v1950 = vrot.slane %v1711, 5
      %v1951 = vsel %vm977, %v1949, %v1950
      %v1952 = vrot.slane %v1950, 4
      %v1953 = vrot.slane %v1712, 5
      %v1954 = vsel %vm977, %v1952, %v1953
      %s1955 = scalar_lea.vmem %s3, 16
      %v1956 = vld [vmem:[%s1955] sm:$0x3]
      %v1957 = vunpack.c.l.b16 %v1930
      %v1958 = vunpack.c.l.b16 %v1933
      %v1959 = vunpack.c.l.b16 %v1937
      %v1960 = vunpack.c.l.b16 %v1940
      %v1961 = vunpack.c.l.b16 %v1944
      %v1962 = vunpack.c.l.b16 %v1947
      %v1963 = vunpack.c.l.b16 %v1951
      %v1964 = vunpack.c.l.b16 %v1954
      %v1965 = vpack.c.b16 %v1958, %v1957
      %v1966 = vpack.c.b16 %v1960, %v1959
      %v1967 = vpack.c.b16 %v1962, %v1961
      %v1968 = vpack.c.b16 %v1964, %v1963
      %v1970 = vsel %vm781, %v1965, 0
      %v1973 = vsel %vm781, %v1966, 0
      %v1976 = vsel %vm781, %v1967, 0
      %v1979 = vsel %vm781, %v1968, 0
      %v1982 = vsel %vm794, %v1956, 0
      %1984 = vmatprep.subr.bf16.mxu0 0
      %1985 = vmatpush1.bf16.msra.mxu0 %v1982
      %1986 = vmatprep.subr.bf16.mxu0 0
      %1987 = vmatpush1.bf16.msra.mxu0 0
      %1988 = vmatprep.subr.bf16.mxu0 0
      %1989 = vmatpush1.bf16.msra.mxu0 0
      %1990 = vmatprep.subr.bf16.mxu0 0
      %1991 = vmatpush1.bf16.msra.mxu0 0
      %1992 = vmatprep.subr.bf16.mxu0 0
      %1993 = vmatpush1.bf16.msra.mxu0 0
      %1994 = vmatprep.subr.bf16.mxu0 0
      %1995 = vmatpush1.bf16.msra.mxu0 0
      %1996 = vmatprep.subr.bf16.mxu0 0
      %1997 = vmatpush1.bf16.msra.mxu0 0
      %1998 = vmatprep.subr.bf16.mxu0 0
      %1999 = vmatpush1.bf16.msra.mxu0 0
      %2000 = vmatprep.subr.bf16.mxu0 0
      %2001 = vmatpush1.bf16.msra.mxu0 0
      %2002 = vmatprep.subr.bf16.mxu0 0
      %2003 = vmatpush1.bf16.msra.mxu0 0
      %2004 = vmatprep.subr.bf16.mxu0 0
      %2005 = vmatpush1.bf16.msra.mxu0 0
      %2006 = vmatprep.subr.bf16.mxu0 0
      %2007 = vmatpush1.bf16.msra.mxu0 0
      %2008 = vmatprep.subr.bf16.mxu0 0
      %2009 = vmatpush1.bf16.msra.mxu0 0
      %2010 = vmatprep.subr.bf16.mxu0 0
      %2011 = vmatpush1.bf16.msra.mxu0 0
      %2012 = vmatprep.subr.bf16.mxu0 0
      %2013 = vmatpush1.bf16.msra.mxu0 0
      %2014 = vmatprep.subr.bf16.mxu0 0
      %2015 = vmatpush1.bf16.msra.mxu0 0
      %2016 = vmatprep.mubr.bf16.mxu0 0
      %2017 = vmatmul.mubr.bf16.gmra.mrb[0].mxu0 %v1970
      %v2018 = vpop.f32.mrb[0].mxu0
      %v2019 = vadd.f32 0.0, %v2018
      %v2020 = vpop.f32.mrb[0].mxu0
      %v2021 = vpop.f32.mrb[0].mxu0
      %v2022 = vadd.f32 0.0, %v2021
      %v2023 = vpop.f32.mrb[0].mxu0
      %2024 = vmatprep.mubr.bf16.mxu0 0
      %2025 = vmatmul.mubr.bf16.gmra.mrb[0].mxu0 %v1973
      %v2026 = vpop.f32.mrb[0].mxu0
      %v2027 = vadd.f32 0.0, %v2026
      %v2028 = vpop.f32.mrb[0].mxu0
      %v2029 = vpop.f32.mrb[0].mxu0
      %v2030 = vadd.f32 0.0, %v2029
      %v2031 = vpop.f32.mrb[0].mxu0
      %2032 = vmatprep.mubr.bf16.mxu0 0
      %2033 = vmatmul.mubr.bf16.gmra.mrb[0].mxu0 %v1976
      %v2034 = vpop.f32.mrb[0].mxu0
      %v2035 = vadd.f32 0.0, %v2034
      %v2036 = vpop.f32.mrb[0].mxu0
      %v2037 = vpop.f32.mrb[0].mxu0
      %v2038 = vadd.f32 0.0, %v2037
      %v2039 = vpop.f32.mrb[0].mxu0
      %2040 = vmatprep.mubr.bf16.mxu0 0
      %2041 = vmatmul.mubr.bf16.gmra.mrb[0].mxu0 %v1979
      %v2042 = vpop.f32.mrb[0].mxu0
      %v2043 = vadd.f32 0.0, %v2042
      %v2044 = vpop.f32.mrb[0].mxu0
      %v2045 = vpop.f32.mrb[0].mxu0
      %v2046 = vadd.f32 0.0, %v2045
      %v2047 = vpop.f32.mrb[0].mxu0
      %2048 = vdwg.mxu0
      %v2049 = vadd.f32 %v1903, %v2019
      %v2050 = vadd.f32 %v1904, %v2022
      %v2051 = vadd.f32 %v1905, %v2027
      %v2052 = vadd.f32 %v1906, %v2030
      %v2053 = vadd.f32 %v1907, %v2035
      %v2054 = vadd.f32 %v1908, %v2038
      %v2055 = vadd.f32 %v1909, %v2043
      %v2056 = vadd.f32 %v1910, %v2046
      %v2057 = vld [vmem:[%s4] sm:$0x1]
      %v2059 = vlaneseq
      %v2060 = vshrl.u32 %v2059, 7
      %v2061 = vsub.s32 0, %v2060
      %v2062 = vrot.slane %v2057, %v2061
      %v2064 = vmul.f32 %v2049, %v2062
      %v2065 = vmul.f32 %v2050, %v2062
      %v2066 = vmul.f32 %v2051, %v2062
      %v2067 = vmul.f32 %v2052, %v2062
      %v2068 = vmul.f32 %v2053, %v2062
      %v2069 = vmul.f32 %v2054, %v2062
      %v2070 = vmul.f32 %v2055, %v2062
      %v2071 = vmul.f32 %v2056, %v2062
      %v2072 = vld [vmem:[%s5] sm:$0x1]
      %v2074 = vlaneseq
      %v2075 = vshrl.u32 %v2074, 7
      %v2076 = vsub.s32 0, %v2075
      %v2077 = vrot.slane %v2072, %v2076
      %v2079 = vadd.f32 %v2064, %v2077
      %v2080 = vadd.f32 %v2065, %v2077
      %v2081 = vadd.f32 %v2066, %v2077
      %v2082 = vadd.f32 %v2067, %v2077
      %v2083 = vadd.f32 %v2068, %v2077
      %v2084 = vadd.f32 %v2069, %v2077
      %v2085 = vadd.f32 %v2070, %v2077
      %v2086 = vadd.f32 %v2071, %v2077
      %v2087 = vmax.f32 %v2079, 0.0
      %v2088 = vmax.f32 %v2080, 0.0
      %v2089 = vmax.f32 %v2081, 0.0
      %v2090 = vmax.f32 %v2082, 0.0
      %v2091 = vmax.f32 %v2083, 0.0
      %v2092 = vmax.f32 %v2084, 0.0
      %v2093 = vmax.f32 %v2085, 0.0
      %v2094 = vmax.f32 %v2086, 0.0
      %v2095 = vpack.c.bf16 %v2088, %v2087
      %v2096 = vpack.c.bf16 %v2090, %v2089
      %v2097 = vpack.c.bf16 %v2092, %v2091
      %v2098 = vpack.c.bf16 %v2094, %v2093
      %v2103 = vunpack.c.l.b16 %v2095
      %v2104 = vunpack.c.h.b16 %v2095
      %v2105 = vunpack.c.l.b16 %v2096
      %v2106 = vunpack.c.h.b16 %v2096
      %v2107 = vunpack.c.l.b16 %v2097
      %v2108 = vunpack.c.h.b16 %v2097
      %v2109 = vunpack.c.l.b16 %v2098
      %v2110 = vunpack.c.h.b16 %v2098
      %v2111 = vpack.c.b16 %v2103, %v2103
      %v2112 = vpack.c.b16 %v2104, %v2104
      %v2113 = vpack.c.b16 %v2105, %v2105
      %v2114 = vpack.c.b16 %v2106, %v2106
      %v2115 = vpack.c.b16 %v2107, %v2107
      %v2116 = vpack.c.b16 %v2108, %v2108
      %v2117 = vpack.c.b16 %v2109, %v2109
      %v2118 = vpack.c.b16 %v2110, %v2110
      %vm2127 = vcmask 60416
      %2128 = vst.msk [vmem:[%s418] sm:$0xf] %vm2127, %v2111
      %2129 = vst.msk [vmem:[%s418 + $0x4] sm:$0xf] %vm2127, %v2112
      %2130 = vst.msk [vmem:[%s418 + $0x8] sm:$0xf] %vm2127, %v2113
      %2131 = vst.msk [vmem:[%s418 + $0xc] sm:$0xf] %vm2127, %v2114
      %2132 = vst.msk [vmem:[%s418 + $0x10] sm:$0xf] %vm2127, %v2115
      %2133 = vst.msk [vmem:[%s418 + $0x14] sm:$0xf] %vm2127, %v2116
      %2134 = vst.msk [vmem:[%s418 + $0x18] sm:$0xf] %vm2127, %v2117
      %2135 = vst.msk [vmem:[%s418 + $0x1c] sm:$0xf] %vm2127, %v2118
      %s2136 = smul.u32 4, %s22
      %p2137 = scmp.lt.s32.totalorder %s21, 1
      %s2138 = scalar_select %p2137, %s21, 1
      %p2139 = scmp.lt.s32.totalorder %s2136, 15
      %s2140 = scalar_select %p2139, %s2136, 15
      %s2141 = smul.addr %s2140, 2
      %s2142 = smul.addr %s2138, 32
      %s2143 = sadd.s32 %s2141, %s2142
      %s2144 = smul.addr %s2143, 4
      %s2145 = scalar_lea.vmem %s6, %s2144
      // Predicated region
      $region45: #{tpu_custom_call.1} parent=43 // pred_check
        %p2146 = pneg %p212
      $region46: #{tpu_custom_call.1} parent=43 // pred_check_branch
        %2148 = sbr.rel (%p2146) target = $region48
      $region47: #{tpu_custom_call.1} parent=43 // pred_region
        %s2149 = smul.u32 4, %s22
      $region48: #{tpu_custom_call.1} parent=43 // pred_fallthru
        _
    $region44: #{tpu_custom_call.1} parent=5 // pred_fallthru
      _
    %p2150 = scmp.le.s32.totalorder 2, %s12
    // Predicated region
    $region49: #{tpu_custom_call.1} parent=5 // pred_check
      %p2151 = pneg %p2150
    $region50: #{tpu_custom_call.1} parent=5 // pred_check_branch
      %2153 = sbr.rel (%p2151) target = $region52
    $region51: #{tpu_custom_call.1} parent=5 // pred_region
      %s2154 = ssub.s32 %s12, 2
      // Predicated region
      $region53: #{tpu_custom_call.1} parent=51 // pred_check
        %p2155 = pneg %p218
      $region54: #{tpu_custom_call.1} parent=51 // pred_check_branch
        %2157 = sbr.rel (%p2155) target = $region56
      $region55: #{tpu_custom_call.1} parent=51 // pred_region
        %s2158 = smul.u32 4, %s24
        %p2159 = scmp.lt.s32.totalorder %s23, 1
        %s2160 = scalar_select %p2159, %s23, 1
        %p2161 = scmp.lt.s32.totalorder %s2158, 15
        %s2162 = scalar_select %p2161, %s2158, 15
        %s2163 = smul.addr %s2162, 2
        %s2164 = smul.addr %s2160, 32
        %s2165 = sadd.s32 %s2163, %s2164
        %s2166 = smul.addr %s2165, 4
        %s2167 = scalar_lea.vmem %s6, %s2166
      $region56: #{tpu_custom_call.1} parent=51 // pred_fallthru
        _
    $region52: #{tpu_custom_call.1} parent=5 // pred_fallthru
      _
  $region6: #{tpu_custom_call.1} parent=0 // loop_footer
    %s16 = sadd.s32 1, %s12
  $region7: #{tpu_custom_call.1} parent=0 // loop_footer_branch
    %11 = sbr.rel target = $region3
  $region8: #{tpu_custom_call.1} parent=0 // loop_exit
    _

</llo_original>
